<compile_context>
chip_gen: v7x
topology: tpu7x:2x2x1
jax: 0.10.0
libtpu: 0.0.40
codegen_flags: <defaults>
</compile_context>

<pallas_src>
import functools

import jax
import jax.numpy as jnp
from jax.experimental import pallas as pl
from jax.experimental.pallas import tpu as pltpu


# ----------------------------- fused Pallas kernel ---------------------------

def _fused_kernel(x_ref, wc_ref, bc_ref, w1_ref, b1_ref, w2_ref, b2_ref,
                  w3_ref, b3_ref, out_ref, *, num_actions):
    bf16 = jnp.bfloat16

    # conv encoder as dense matmul + bias + ReLU   (bf16 operands, f32 acc)
    x = x_ref[...]                                           # [B, Cin*H*W] bf16
    enc = jnp.dot(x, wc_ref[...], preferred_element_type=jnp.float32)
    enc = jnp.maximum(enc + bc_ref[...], 0.0)                # [B, E] f32

    # merged (value | advantage) MLP chain
    h = jnp.dot(enc.astype(bf16), w1_ref[...],
                preferred_element_type=jnp.float32)
    h = jnp.maximum(h + b1_ref[...], 0.0)                    # [B, 2H]
    h = jnp.dot(h.astype(bf16), w2_ref[...],
                preferred_element_type=jnp.float32)
    h = jnp.maximum(h + b2_ref[...], 0.0)                    # [B, 2H]
    o = jnp.dot(h.astype(bf16), w3_ref[...],
                preferred_element_type=jnp.float32) + b3_ref[...]   # [B, 128]

    # lane 0 = value, lanes 1..A = advantage, lanes >A are zero padding.
    b, lanes = o.shape
    lane = jax.lax.broadcasted_iota(jnp.int32, (b, lanes), 1)
    adv_mask = (lane >= 1) & (lane <= num_actions)
    # torch adv.mean() = mean over ALL [B, A] elements (scalar)
    adv_mean = jnp.sum(jnp.where(adv_mask, o, 0.0)) * (1.0 / (b * num_actions))

    val = o[:, 0:1]                                          # [B, 1]
    out_ref[...] = val + o - adv_mean                        # lane-dense [B, 128]


# --------------------------------- wrapper -----------------------------------

def _vmem_spec():
    return pl.BlockSpec(memory_space=pltpu.MemorySpace.VMEM)


def val_advantage_forward(state, packed):
    """state: [B, C, H, W] (NCHW, like PyTorch)."""
    B = state.shape[0]
    A = packed["num_actions"]
    L = packed["out_lanes"]

    x = state.reshape(B, -1).astype(jnp.bfloat16)            # (c, h, w) flatten
    kernel = functools.partial(_fused_kernel, num_actions=A)

    out = pl.pallas_call(
        kernel,
        out_shape=jax.ShapeDtypeStruct((B, L), jnp.float32),
        in_specs=[_vmem_spec()] * 9,
        out_specs=_vmem_spec(),
    )(x, packed["wc"], packed["bc"], packed["w1"], packed["b1"],
      packed["w2"], packed["b2"], packed["w3"], packed["b3"])

    return out[:, 1:1 + A]                                   # [B, num_actions]


# --------------------------- parameter packing --------------------------------

def pack_params(params, *, in_shape, stride=2, pad=1, out_lanes=128):
    """One-time prep: conv -> exact dense matmul, merge the two MLPs, cast bf16."""
    conv_w, conv_b = params["conv"]                          # [Cout,Cin,KH,KW], [Cout]
    Cout, Cin, KH, KW = conv_w.shape
    _, H, W = in_shape
    OH = (H + 2 * pad - KH) // stride + 1
    OW = (W + 2 * pad - KW) // stride + 1

    # Exact dense lowering of the conv: column r of the basis is the r-th unit
    # "image"; conv(x) = x_flat @ Wc by linearity.  Columns come out already in
    # torch Flatten() order (cout, oh, ow), so W1 needs no row permutation.
    eye = jnp.eye(Cin * H * W, dtype=jnp.float32).reshape(Cin * H * W, Cin, H, W)
    wc = jax.lax.conv_general_dilated(
        eye, conv_w, window_strides=(stride, stride),
        padding=((pad, pad), (pad, pad)),
        dimension_numbers=("NCHW", "OIHW", "NCHW"),
    ).reshape(Cin * H * W, Cout * OH * OW)                   # [Cin*H*W, E]
    bc = jnp.repeat(conv_b, OH * OW).reshape(1, Cout * OH * OW)

    vw1, vb1, vw2, vb2, vw3, vb3 = params["value"]
    aw1, ab1, aw2, ab2, aw3, ab3 = params["advantage"]
    H1v, H2v = vw2.shape
    H1a, H2a = aw2.shape
    A = aw3.shape[1]
    assert 1 + A <= out_lanes

    # layer 1: plain column concat
    w1 = jnp.concatenate([vw1, aw1], axis=1)                 # [E, H1v+H1a]
    b1 = jnp.concatenate([vb1, ab1], axis=1)
    # layer 2: block-diagonal
    w2 = jnp.concatenate(
        [jnp.concatenate([vw2, jnp.zeros((H1v, H2a), jnp.float32)], axis=1),
         jnp.concatenate([jnp.zeros((H1a, H2v), jnp.float32), aw2], axis=1)],
        axis=0)                                              # [H1v+H1a, H2v+H2a]
    b2 = jnp.concatenate([vb2, ab2], axis=1)
    # layer 3: lane 0 = value, lanes 1..A = advantage, padded to out_lanes
    w3 = jnp.zeros((H2v + H2a, out_lanes), jnp.float32)
    w3 = w3.at[:H2v, 0:1].set(vw3).at[H2v:, 1:1 + A].set(aw3)
    b3 = jnp.zeros((1, out_lanes), jnp.float32)
    b3 = b3.at[:, 0:1].set(vb3).at[:, 1:1 + A].set(ab3)

    bf16 = jnp.bfloat16
    return {
        "wc": wc.astype(bf16), "bc": bc,
        "w1": w1.astype(bf16), "b1": b1,
        "w2": w2.astype(bf16), "b2": b2,
        "w3": w3.astype(bf16), "b3": b3,
        "num_actions": A, "out_lanes": out_lanes,
    }


# --------------------------- parameter construction ---------------------------

def _mlp_params(key, sizes):
    """sizes = [in, h1, h2, out]; weights stored [in, out] for x @ W."""
    params = []
    for i in range(len(sizes) - 1):
        key, kw_, kb_ = jax.random.split(key, 3)
        w = 0.1 * jax.random.normal(kw_, (sizes[i], sizes[i + 1]), jnp.float32)
        b = 0.05 * jax.random.normal(kb_, (1, sizes[i + 1]), jnp.float32)
        params += [w, b]
    return tuple(params)


def init_params(key, cin, cout, kh, kw, enc_vec_size, hidden, num_actions):
    k_conv_w, k_conv_b, k_val, k_adv = jax.random.split(key, 4)
    conv_w = 0.1 * jax.random.normal(k_conv_w, (cout, cin, kh, kw), jnp.float32)
    conv_b = 0.05 * jax.random.normal(k_conv_b, (cout,), jnp.float32)
    return {
        "conv": (conv_w, conv_b),
        "value": _mlp_params(k_val, [enc_vec_size, *hidden, 1]),
        "advantage": _mlp_params(k_adv, [enc_vec_size, *hidden, num_actions]),
    }


# ------------------------------ pure-JAX reference ----------------------------

def _reference(state, params):
    conv_w, conv_b = params["conv"]
    out = jax.lax.conv_general_dilated(
        state, conv_w, window_strides=(2, 2), padding=((1, 1), (1, 1)),
        dimension_numbers=("NCHW", "OIHW", "NCHW"))
    out = jnp.maximum(out + conv_b[None, :, None, None], 0.0)
    enc = out.reshape(out.shape[0], -1)

    def mlp(p):
        w1, b1, w2, b2, w3, b3 = p
        h = jnp.maximum(enc @ w1 + b1, 0.0)
        h = jnp.maximum(h @ w2 + b2, 0.0)
        return h @ w3 + b3

    val = mlp(params["value"])
    adv = mlp(params["advantage"])
    return val + adv - adv.mean()


# ----------------------------------- main --------------------------------------

if __name__ == "__main__":
    B, C, H, W = 2, 4, 16, 16          # state  (PyTorch NCHW)
    COUT, KH, KW = 8, 3, 3             # conv encoder: Conv2d(C, 8, 3, stride=2, pad=1)+ReLU
    OH, OW = H // 2, W // 2
    ENC_VEC = COUT * OH * OW           # enc_vec_size = 512
    HIDDEN = (32, 32)                  # Params.network['hidden_layers']
    NUM_ACTIONS = 6

    key = jax.random.PRNGKey(0)
    k_state, k_params = jax.random.split(key)
    state = jax.random.normal(k_state, (B, C, H, W), jnp.float32)
    params = init_params(k_params, C, COUT, KH, KW, ENC_VEC, HIDDEN, NUM_ACTIONS)

    packed = pack_params(params, in_shape=(C, H, W))          # one-time prep

    out = jax.block_until_ready(val_advantage_forward(state, packed))
    ref = jax.block_until_ready(_reference(state, params))

    assert out.shape == (B, NUM_ACTIONS), out.shape
    # bf16 MXU operands with f32 accumulation; epilogue in f32
    assert jnp.allclose(out, ref, rtol=5e-2, atol=5e-2), (out, ref)

    print("KERNEL_OK")
</pallas_src>

<mosaic_0001>
module attributes {stable_mosaic.version = 11 : i64} {
  func.func @_fused_kernel(%arg0: memref<2x1024xbf16, #tpu.memory_space<vmem>>, %arg1: memref<1024x512xbf16, #tpu.memory_space<vmem>>, %arg2: memref<1x512xf32, #tpu.memory_space<vmem>>, %arg3: memref<512x64xbf16, #tpu.memory_space<vmem>>, %arg4: memref<1x64xf32, #tpu.memory_space<vmem>>, %arg5: memref<64x64xbf16, #tpu.memory_space<vmem>>, %arg6: memref<1x64xf32, #tpu.memory_space<vmem>>, %arg7: memref<64x128xbf16, #tpu.memory_space<vmem>>, %arg8: memref<1x128xf32, #tpu.memory_space<vmem>>, %arg9: memref<2x128xf32, #tpu.memory_space<vmem>>) attributes {dimension_semantics = [], scalar_prefetch = 0 : i64, scratch_operands = 0 : i64, tpu.core_type = #tpu.core_type<tc>} {
    %c0 = arith.constant 0 : index
    %c0_0 = arith.constant 0 : index
    %0 = vector.load %arg0[%c0, %c0_0] : memref<2x1024xbf16, #tpu.memory_space<vmem>>, vector<2x1024xbf16>
    %c0_1 = arith.constant 0 : index
    %c0_2 = arith.constant 0 : index
    %1 = vector.load %arg1[%c0_1, %c0_2] : memref<1024x512xbf16, #tpu.memory_space<vmem>>, vector<1024x512xbf16>
    %cst = arith.constant dense<0.000000e+00> : vector<2x512xf32>
    %2 = tpu.matmul %0, %1, %cst {dimension_numbers = #tpu.dot_dimension_numbers<[1], [0], [0], [1], [0, 0, 1, 1], [], []>} : vector<2x1024xbf16>, vector<1024x512xbf16>, vector<2x512xf32> -> vector<2x512xf32>
    %c0_3 = arith.constant 0 : index
    %c0_4 = arith.constant 0 : index
    %3 = vector.load %arg2[%c0_3, %c0_4] : memref<1x512xf32, #tpu.memory_space<vmem>>, vector<1x512xf32>
    %4 = vector.broadcast %3 : vector<1x512xf32> to vector<2x512xf32>
    %5 = arith.addf %2, %4 : vector<2x512xf32>
    %cst_5 = arith.constant 0.000000e+00 : f32
    %6 = vector.broadcast %cst_5 : f32 to vector<2x512xf32>
    %7 = arith.maximumf %5, %6 : vector<2x512xf32>
    %8 = arith.truncf %7 : vector<2x512xf32> to vector<2x512xbf16>
    %c0_6 = arith.constant 0 : index
    %c0_7 = arith.constant 0 : index
    %9 = vector.load %arg3[%c0_6, %c0_7] : memref<512x64xbf16, #tpu.memory_space<vmem>>, vector<512x64xbf16>
    %cst_8 = arith.constant dense<0.000000e+00> : vector<2x64xf32>
    %10 = tpu.matmul %8, %9, %cst_8 {dimension_numbers = #tpu.dot_dimension_numbers<[1], [0], [0], [1], [0, 0, 1, 1], [], []>} : vector<2x512xbf16>, vector<512x64xbf16>, vector<2x64xf32> -> vector<2x64xf32>
    %c0_9 = arith.constant 0 : index
    %c0_10 = arith.constant 0 : index
    %11 = vector.load %arg4[%c0_9, %c0_10] : memref<1x64xf32, #tpu.memory_space<vmem>>, vector<1x64xf32>
    %12 = vector.broadcast %11 : vector<1x64xf32> to vector<2x64xf32>
    %13 = arith.addf %10, %12 : vector<2x64xf32>
    %cst_11 = arith.constant 0.000000e+00 : f32
    %14 = vector.broadcast %cst_11 : f32 to vector<2x64xf32>
    %15 = arith.maximumf %13, %14 : vector<2x64xf32>
    %16 = arith.truncf %15 : vector<2x64xf32> to vector<2x64xbf16>
    %c0_12 = arith.constant 0 : index
    %c0_13 = arith.constant 0 : index
    %17 = vector.load %arg5[%c0_12, %c0_13] : memref<64x64xbf16, #tpu.memory_space<vmem>>, vector<64x64xbf16>
    %cst_14 = arith.constant dense<0.000000e+00> : vector<2x64xf32>
    %18 = tpu.matmul %16, %17, %cst_14 {dimension_numbers = #tpu.dot_dimension_numbers<[1], [0], [0], [1], [0, 0, 1, 1], [], []>} : vector<2x64xbf16>, vector<64x64xbf16>, vector<2x64xf32> -> vector<2x64xf32>
    %c0_15 = arith.constant 0 : index
    %c0_16 = arith.constant 0 : index
    %19 = vector.load %arg6[%c0_15, %c0_16] : memref<1x64xf32, #tpu.memory_space<vmem>>, vector<1x64xf32>
    %20 = vector.broadcast %19 : vector<1x64xf32> to vector<2x64xf32>
    %21 = arith.addf %18, %20 : vector<2x64xf32>
    %cst_17 = arith.constant 0.000000e+00 : f32
    %22 = vector.broadcast %cst_17 : f32 to vector<2x64xf32>
    %23 = arith.maximumf %21, %22 : vector<2x64xf32>
    %24 = arith.truncf %23 : vector<2x64xf32> to vector<2x64xbf16>
    %c0_18 = arith.constant 0 : index
    %c0_19 = arith.constant 0 : index
    %25 = vector.load %arg7[%c0_18, %c0_19] : memref<64x128xbf16, #tpu.memory_space<vmem>>, vector<64x128xbf16>
    %cst_20 = arith.constant dense<0.000000e+00> : vector<2x128xf32>
    %26 = tpu.matmul %24, %25, %cst_20 {dimension_numbers = #tpu.dot_dimension_numbers<[1], [0], [0], [1], [0, 0, 1, 1], [], []>} : vector<2x64xbf16>, vector<64x128xbf16>, vector<2x128xf32> -> vector<2x128xf32>
    %c0_21 = arith.constant 0 : index
    %c0_22 = arith.constant 0 : index
    %27 = vector.load %arg8[%c0_21, %c0_22] : memref<1x128xf32, #tpu.memory_space<vmem>>, vector<1x128xf32>
    %28 = vector.broadcast %27 : vector<1x128xf32> to vector<2x128xf32>
    %29 = arith.addf %26, %28 : vector<2x128xf32>
    %30 = tpu.iota {dimensions = array<i32: 1>} : vector<2x128xi32>
    %c1_i32 = arith.constant 1 : i32
    %31 = vector.broadcast %c1_i32 : i32 to vector<2x128xi32>
    %32 = arith.cmpi sge, %30, %31 : vector<2x128xi32>
    %c6_i32 = arith.constant 6 : i32
    %33 = vector.broadcast %c6_i32 : i32 to vector<2x128xi32>
    %34 = arith.cmpi sle, %30, %33 : vector<2x128xi32>
    %35 = arith.andi %32, %34 : vector<2x128xi1>
    %cst_23 = arith.constant 0.000000e+00 : f32
    %36 = vector.broadcast %cst_23 : f32 to vector<2x128xf32>
    %37 = arith.select %35, %29, %36 : vector<2x128xi1>, vector<2x128xf32>
    %38 = vector.shape_cast %37 : vector<2x128xf32> to vector<1x2x128xf32>
    %cst_24 = arith.constant dense<0.000000e+00> : vector<1xf32>
    %39 = vector.multi_reduction <add>, %38, %cst_24 [1, 2] : vector<1x2x128xf32> to vector<1xf32>
    %40 = vector.shape_cast %39 : vector<1xf32> to vector<1x1x1xf32>
    %41 = vector.extract %40[0, 0, 0] : f32 from vector<1x1x1xf32>
    %cst_25 = arith.constant 0.0833333358 : f32
    %42 = arith.mulf %41, %cst_25 : f32
    %43 = vector.extract_strided_slice %29 {offsets = [0, 0], sizes = [2, 1], strides = [1, 1]} : vector<2x128xf32> to vector<2x1xf32>
    %44 = vector.broadcast %43 : vector<2x1xf32> to vector<2x128xf32>
    %45 = arith.addf %44, %29 : vector<2x128xf32>
    %46 = vector.broadcast %42 : f32 to vector<2x128xf32>
    %47 = arith.subf %45, %46 : vector<2x128xf32>
    %c0_26 = arith.constant 0 : index
    %c0_27 = arith.constant 0 : index
    %48 = vector.load %arg9[%c0_26, %c0_27] : memref<2x128xf32, #tpu.memory_space<vmem>>, vector<2x128xf32>
    tpu.vector_store %arg9[%c0_26, %c0_27], %47 {strides = array<i32>} : memref<2x128xf32, #tpu.memory_space<vmem>>, vector<2x128xf32>,
    return
  }
}

</mosaic_0001>

<llo_original>
// kernel: tpu_custom_call.1
$region0: #{tpu_custom_call.1}
  #allocation0 [shape = 'u32[]', space=smem, size = 0x4, offset = 0x4, fixed_abs, tag = 'smem constant byte address 0x4 - core index']
  #allocation1 [shape = 'u32[144,128]{1,0:T(1,128)}', space=vmem, size = 0x12000, scoped, tag = 'internal scratch']
  %s0 = inlined_call_operand.vmem [shape: bf16[2,1024], index: 0, kind: input, shape index: {}]
  %s1 = inlined_call_operand.hbm [shape: bf16[1024,512], index: 1, kind: input, shape index: {}]
  %s2 = inlined_call_operand.vmem [shape: f32[1,512], index: 2, kind: input, shape index: {}]
  %s3 = inlined_call_operand.vmem [shape: bf16[512,64], index: 3, kind: input, shape index: {}]
  %s4 = inlined_call_operand.vmem [shape: f32[1,64], index: 4, kind: input, shape index: {}]
  %s5 = inlined_call_operand.vmem [shape: bf16[64,64], index: 5, kind: input, shape index: {}]
  %s6 = inlined_call_operand.vmem [shape: f32[1,64], index: 6, kind: input, shape index: {}]
  %s7 = inlined_call_operand.vmem [shape: bf16[64,128], index: 7, kind: input, shape index: {}]
  %s8 = inlined_call_operand.vmem [shape: f32[1,128], index: 8, kind: input, shape index: {}]
  %s9 = inlined_call_operand.hbm [shape: f32[2,128], index: 9, kind: output, shape index: {}]
  %s10 = sld [smem:[#allocation0]]
  $region50: #{tpu_custom_call.1} parent=0
    _
  %s12 = ssub.s32 1, %s10
  %s13 = scalar_select 0, %s12, %s10
  $region1: #{tpu_custom_call.1} parent=0
    #allocation2 [shape = 'u8[1048576]{0}', space=vmem, size = 0x100000, scoped, tag = 'input window, operand 1, single buffered']
    #allocation3 [shape = 's32[1]{0}', space=sflag, size = 0x4, scoped, tag = 'scoped memory for tpu_custom_call.1']
    #allocation4 [shape = 's32[1]{0}', space=sflag, size = 0x4, scoped, tag = 'scoped memory for tpu_custom_call.1']
    #allocation5 [shape = 'u8[1024]{0}', space=vmem, size = 0x400, scoped, tag = 'output window, operand 0, single buffered']
    %14 = vsyncpa [#allocation3], 0
    %15 = vsyncpa [#allocation4], 0
    // Predicated region
    $region2: #{tpu_custom_call.1} parent=1 // pred_check
      _
    $region3: #{tpu_custom_call.1} parent=1 // pred_check_branch
      %17 = sbr.rel (0) target = $region5
    $region4: #{tpu_custom_call.1} parent=1 // pred_region
      _
    $region5: #{tpu_custom_call.1} parent=1 // pred_fallthru
      _
    // Predicated region
    $region6: #{tpu_custom_call.1} parent=1 // pred_check
      _
    $region7: #{tpu_custom_call.1} parent=1 // pred_check_branch
      %19 = sbr.rel (0) target = $region9
    $region8: #{tpu_custom_call.1} parent=1 // pred_region
      %s21 = ssub.s32 32768, 32768
      %22 = vsyncadd [#allocation3], %s21
      %s23 = sshll.u32 [#allocation2], 4
      %s24 = int_to_ptr.vmem [resolvable:$true] %s23
      %29 = dma.hbm_to_vmem [thread:$0]  %s1, 32768, %s24, [#allocation3], 256, 256, 16
    $region9: #{tpu_custom_call.1} parent=1 // pred_fallthru
      _
    // Predicated region
    $region10: #{tpu_custom_call.1} parent=1 // pred_check
      _
    $region11: #{tpu_custom_call.1} parent=1 // pred_check_branch
      %31 = sbr.rel (0) target = $region13
    $region12: #{tpu_custom_call.1} parent=1 // pred_region
      _
    $region13: #{tpu_custom_call.1} parent=1 // pred_fallthru
      _
    // Predicated region
    $region14: #{tpu_custom_call.1} parent=1 // pred_check
      _
    $region15: #{tpu_custom_call.1} parent=1 // pred_check_branch
      %33 = sbr.rel (0) target = $region17
    $region16: #{tpu_custom_call.1} parent=1 // pred_region
      _
    $region17: #{tpu_custom_call.1} parent=1 // pred_fallthru
      _
    // Predicated region
    $region18: #{tpu_custom_call.1} parent=1 // pred_check
      _
    $region19: #{tpu_custom_call.1} parent=1 // pred_check_branch
      %35 = sbr.rel (0) target = $region21
    $region20: #{tpu_custom_call.1} parent=1 // pred_region
      _
    $region21: #{tpu_custom_call.1} parent=1 // pred_fallthru
      _
    // Predicated region
    $region22: #{tpu_custom_call.1} parent=1 // pred_check
      _
    $region23: #{tpu_custom_call.1} parent=1 // pred_check_branch
      %37 = sbr.rel (0) target = $region25
    $region24: #{tpu_custom_call.1} parent=1 // pred_region
      _
    $region25: #{tpu_custom_call.1} parent=1 // pred_fallthru
      _
    // Predicated region
    $region26: #{tpu_custom_call.1} parent=1 // pred_check
      _
    $region27: #{tpu_custom_call.1} parent=1 // pred_check_branch
      %39 = sbr.rel (0) target = $region29
    $region28: #{tpu_custom_call.1} parent=1 // pred_region
      _
    $region29: #{tpu_custom_call.1} parent=1 // pred_fallthru
      _
    // Predicated region
    $region30: #{tpu_custom_call.1} parent=1 // pred_check
      _
    $region31: #{tpu_custom_call.1} parent=1 // pred_check_branch
      %41 = sbr.rel (0) target = $region33
    $region32: #{tpu_custom_call.1} parent=1 // pred_region
      _
    $region33: #{tpu_custom_call.1} parent=1 // pred_fallthru
      _
    // Predicated region
    $region34: #{tpu_custom_call.1} parent=1 // pred_check
      _
    $region35: #{tpu_custom_call.1} parent=1 // pred_check_branch
      %43 = sbr.rel (0) target = $region37
    $region36: #{tpu_custom_call.1} parent=1 // pred_region
      _
    $region37: #{tpu_custom_call.1} parent=1 // pred_fallthru
      _
    // Predicated region
    $region38: #{tpu_custom_call.1} parent=1 // pred_check
      _
    $region39: #{tpu_custom_call.1} parent=1 // pred_check_branch
      %45 = sbr.rel (0) target = $region41
    $region40: #{tpu_custom_call.1} parent=1 // pred_region
      %46 = dma.done [#allocation3], 32768
    $region41: #{tpu_custom_call.1} parent=1 // pred_fallthru
      _
    %v48 = vld [vmem:[%s0] sm:$0xff]
    %v49 = vld [vmem:[#allocation2] sm:$0xff]
    %v50 = vld [vmem:[#allocation2 + $0x8] sm:$0xff]
    %v51 = vld [vmem:[#allocation2 + $0x10] sm:$0xff]
    %v52 = vld [vmem:[#allocation2 + $0x18] sm:$0xff]
    %v53 = vld [vmem:[#allocation2 + $0x20] sm:$0xff]
    %v54 = vld [vmem:[#allocation2 + $0x28] sm:$0xff]
    %v55 = vld [vmem:[#allocation2 + $0x30] sm:$0xff]
    %v56 = vld [vmem:[#allocation2 + $0x38] sm:$0xff]
    %v57 = vld [vmem:[#allocation2 + $0x40] sm:$0xff]
    %v58 = vld [vmem:[#allocation2 + $0x48] sm:$0xff]
    %v59 = vld [vmem:[#allocation2 + $0x50] sm:$0xff]
    %v60 = vld [vmem:[#allocation2 + $0x58] sm:$0xff]
    %v61 = vld [vmem:[#allocation2 + $0x60] sm:$0xff]
    %v62 = vld [vmem:[#allocation2 + $0x68] sm:$0xff]
    %v63 = vld [vmem:[#allocation2 + $0x70] sm:$0xff]
    %v64 = vld [vmem:[#allocation2 + $0x78] sm:$0xff]
    %v65 = vld [vmem:[#allocation2 + $0x80] sm:$0xff]
    %v66 = vld [vmem:[#allocation2 + $0x88] sm:$0xff]
    %v67 = vld [vmem:[#allocation2 + $0x90] sm:$0xff]
    %v68 = vld [vmem:[#allocation2 + $0x98] sm:$0xff]
    %v69 = vld [vmem:[#allocation2 + $0xa0] sm:$0xff]
    %v70 = vld [vmem:[#allocation2 + $0xa8] sm:$0xff]
    %v71 = vld [vmem:[#allocation2 + $0xb0] sm:$0xff]
    %v72 = vld [vmem:[#allocation2 + $0xb8] sm:$0xff]
    %v73 = vld [vmem:[#allocation2 + $0xc0] sm:$0xff]
    %v74 = vld [vmem:[#allocation2 + $0xc8] sm:$0xff]
    %v75 = vld [vmem:[#allocation2 + $0xd0] sm:$0xff]
    %v76 = vld [vmem:[#allocation2 + $0xd8] sm:$0xff]
    %v77 = vld [vmem:[#allocation2 + $0xe0] sm:$0xff]
    %v78 = vld [vmem:[#allocation2 + $0xe8] sm:$0xff]
    %v79 = vld [vmem:[#allocation2 + $0xf0] sm:$0xff]
    %v80 = vld [vmem:[#allocation2 + $0xf8] sm:$0xff]
    %v81 = vld [vmem:[#allocation2 + $0x100] sm:$0xff]
    %v82 = vld [vmem:[#allocation2 + $0x108] sm:$0xff]
    %v83 = vld [vmem:[#allocation2 + $0x110] sm:$0xff]
    %v84 = vld [vmem:[#allocation2 + $0x118] sm:$0xff]
    %v85 = vld [vmem:[#allocation2 + $0x120] sm:$0xff]
    %v86 = vld [vmem:[#allocation2 + $0x128] sm:$0xff]
    %v87 = vld [vmem:[#allocation2 + $0x130] sm:$0xff]
    %v88 = vld [vmem:[#allocation2 + $0x138] sm:$0xff]
    %v89 = vld [vmem:[#allocation2 + $0x140] sm:$0xff]
    %v90 = vld [vmem:[#allocation2 + $0x148] sm:$0xff]
    %v91 = vld [vmem:[#allocation2 + $0x150] sm:$0xff]
    %v92 = vld [vmem:[#allocation2 + $0x158] sm:$0xff]
    %v93 = vld [vmem:[#allocation2 + $0x160] sm:$0xff]
    %v94 = vld [vmem:[#allocation2 + $0x168] sm:$0xff]
    %v95 = vld [vmem:[#allocation2 + $0x170] sm:$0xff]
    %v96 = vld [vmem:[#allocation2 + $0x178] sm:$0xff]
    %v97 = vld [vmem:[#allocation2 + $0x180] sm:$0xff]
    %v98 = vld [vmem:[#allocation2 + $0x188] sm:$0xff]
    %v99 = vld [vmem:[#allocation2 + $0x190] sm:$0xff]
    %v100 = vld [vmem:[#allocation2 + $0x198] sm:$0xff]
    %v101 = vld [vmem:[#allocation2 + $0x1a0] sm:$0xff]
    %v102 = vld [vmem:[#allocation2 + $0x1a8] sm:$0xff]
    %v103 = vld [vmem:[#allocation2 + $0x1b0] sm:$0xff]
    %v104 = vld [vmem:[#allocation2 + $0x1b8] sm:$0xff]
    %v105 = vld [vmem:[#allocation2 + $0x1c0] sm:$0xff]
    %v106 = vld [vmem:[#allocation2 + $0x1c8] sm:$0xff]
    %v107 = vld [vmem:[#allocation2 + $0x1d0] sm:$0xff]
    %v108 = vld [vmem:[#allocation2 + $0x1d8] sm:$0xff]
    %v109 = vld [vmem:[#allocation2 + $0x1e0] sm:$0xff]
    %v110 = vld [vmem:[#allocation2 + $0x1e8] sm:$0xff]
    %v111 = vld [vmem:[#allocation2 + $0x1f0] sm:$0xff]
    %v112 = vld [vmem:[#allocation2 + $0x1f8] sm:$0xff]
    %v113 = vld [vmem:[#allocation2 + $0x200] sm:$0xff]
    %v114 = vld [vmem:[#allocation2 + $0x208] sm:$0xff]
    %v115 = vld [vmem:[#allocation2 + $0x210] sm:$0xff]
    %v116 = vld [vmem:[#allocation2 + $0x218] sm:$0xff]
    %v117 = vld [vmem:[#allocation2 + $0x220] sm:$0xff]
    %v118 = vld [vmem:[#allocation2 + $0x228] sm:$0xff]
    %v119 = vld [vmem:[#allocation2 + $0x230] sm:$0xff]
    %v120 = vld [vmem:[#allocation2 + $0x238] sm:$0xff]
    %v121 = vld [vmem:[#allocation2 + $0x240] sm:$0xff]
    %v122 = vld [vmem:[#allocation2 + $0x248] sm:$0xff]
    %v123 = vld [vmem:[#allocation2 + $0x250] sm:$0xff]
    %v124 = vld [vmem:[#allocation2 + $0x258] sm:$0xff]
    %v125 = vld [vmem:[#allocation2 + $0x260] sm:$0xff]
    %v126 = vld [vmem:[#allocation2 + $0x268] sm:$0xff]
    %v127 = vld [vmem:[#allocation2 + $0x270] sm:$0xff]
    %v128 = vld [vmem:[#allocation2 + $0x278] sm:$0xff]
    %v129 = vld [vmem:[#allocation2 + $0x280] sm:$0xff]
    %v130 = vld [vmem:[#allocation2 + $0x288] sm:$0xff]
    %v131 = vld [vmem:[#allocation2 + $0x290] sm:$0xff]
    %v132 = vld [vmem:[#allocation2 + $0x298] sm:$0xff]
    %v133 = vld [vmem:[#allocation2 + $0x2a0] sm:$0xff]
    %v134 = vld [vmem:[#allocation2 + $0x2a8] sm:$0xff]
    %v135 = vld [vmem:[#allocation2 + $0x2b0] sm:$0xff]
    %v136 = vld [vmem:[#allocation2 + $0x2b8] sm:$0xff]
    %v137 = vld [vmem:[#allocation2 + $0x2c0] sm:$0xff]
    %v138 = vld [vmem:[#allocation2 + $0x2c8] sm:$0xff]
    %v139 = vld [vmem:[#allocation2 + $0x2d0] sm:$0xff]
    %v140 = vld [vmem:[#allocation2 + $0x2d8] sm:$0xff]
    %v141 = vld [vmem:[#allocation2 + $0x2e0] sm:$0xff]
    %v142 = vld [vmem:[#allocation2 + $0x2e8] sm:$0xff]
    %v143 = vld [vmem:[#allocation2 + $0x2f0] sm:$0xff]
    %v144 = vld [vmem:[#allocation2 + $0x2f8] sm:$0xff]
    %v145 = vld [vmem:[#allocation2 + $0x300] sm:$0xff]
    %v146 = vld [vmem:[#allocation2 + $0x308] sm:$0xff]
    %v147 = vld [vmem:[#allocation2 + $0x310] sm:$0xff]
    %v148 = vld [vmem:[#allocation2 + $0x318] sm:$0xff]
    %v149 = vld [vmem:[#allocation2 + $0x320] sm:$0xff]
    %v150 = vld [vmem:[#allocation2 + $0x328] sm:$0xff]
    %v151 = vld [vmem:[#allocation2 + $0x330] sm:$0xff]
    %v152 = vld [vmem:[#allocation2 + $0x338] sm:$0xff]
    %v153 = vld [vmem:[#allocation2 + $0x340] sm:$0xff]
    %v154 = vld [vmem:[#allocation2 + $0x348] sm:$0xff]
    %v155 = vld [vmem:[#allocation2 + $0x350] sm:$0xff]
    %v156 = vld [vmem:[#allocation2 + $0x358] sm:$0xff]
    %v157 = vld [vmem:[#allocation2 + $0x360] sm:$0xff]
    %v158 = vld [vmem:[#allocation2 + $0x368] sm:$0xff]
    %v159 = vld [vmem:[#allocation2 + $0x370] sm:$0xff]
    %v160 = vld [vmem:[#allocation2 + $0x378] sm:$0xff]
    %v161 = vld [vmem:[#allocation2 + $0x380] sm:$0xff]
    %v162 = vld [vmem:[#allocation2 + $0x388] sm:$0xff]
    %v163 = vld [vmem:[#allocation2 + $0x390] sm:$0xff]
    %v164 = vld [vmem:[#allocation2 + $0x398] sm:$0xff]
    %v165 = vld [vmem:[#allocation2 + $0x3a0] sm:$0xff]
    %v166 = vld [vmem:[#allocation2 + $0x3a8] sm:$0xff]
    %v167 = vld [vmem:[#allocation2 + $0x3b0] sm:$0xff]
    %v168 = vld [vmem:[#allocation2 + $0x3b8] sm:$0xff]
    %v169 = vld [vmem:[#allocation2 + $0x3c0] sm:$0xff]
    %v170 = vld [vmem:[#allocation2 + $0x3c8] sm:$0xff]
    %v171 = vld [vmem:[#allocation2 + $0x3d0] sm:$0xff]
    %v172 = vld [vmem:[#allocation2 + $0x3d8] sm:$0xff]
    %v173 = vld [vmem:[#allocation2 + $0x3e0] sm:$0xff]
    %v174 = vld [vmem:[#allocation2 + $0x3e8] sm:$0xff]
    %v175 = vld [vmem:[#allocation2 + $0x3f0] sm:$0xff]
    %v176 = vld [vmem:[#allocation2 + $0x3f8] sm:$0xff]
    %v177 = vld [vmem:[#allocation2 + $0x400] sm:$0xff]
    %v178 = vld [vmem:[#allocation2 + $0x408] sm:$0xff]
    %v179 = vld [vmem:[#allocation2 + $0x410] sm:$0xff]
    %v180 = vld [vmem:[#allocation2 + $0x418] sm:$0xff]
    %v181 = vld [vmem:[#allocation2 + $0x420] sm:$0xff]
    %v182 = vld [vmem:[#allocation2 + $0x428] sm:$0xff]
    %v183 = vld [vmem:[#allocation2 + $0x430] sm:$0xff]
    %v184 = vld [vmem:[#allocation2 + $0x438] sm:$0xff]
    %v185 = vld [vmem:[#allocation2 + $0x440] sm:$0xff]
    %v186 = vld [vmem:[#allocation2 + $0x448] sm:$0xff]
    %v187 = vld [vmem:[#allocation2 + $0x450] sm:$0xff]
    %v188 = vld [vmem:[#allocation2 + $0x458] sm:$0xff]
    %v189 = vld [vmem:[#allocation2 + $0x460] sm:$0xff]
    %v190 = vld [vmem:[#allocation2 + $0x468] sm:$0xff]
    %v191 = vld [vmem:[#allocation2 + $0x470] sm:$0xff]
    %v192 = vld [vmem:[#allocation2 + $0x478] sm:$0xff]
    %v193 = vld [vmem:[#allocation2 + $0x480] sm:$0xff]
    %v194 = vld [vmem:[#allocation2 + $0x488] sm:$0xff]
    %v195 = vld [vmem:[#allocation2 + $0x490] sm:$0xff]
    %v196 = vld [vmem:[#allocation2 + $0x498] sm:$0xff]
    %v197 = vld [vmem:[#allocation2 + $0x4a0] sm:$0xff]
    %v198 = vld [vmem:[#allocation2 + $0x4a8] sm:$0xff]
    %v199 = vld [vmem:[#allocation2 + $0x4b0] sm:$0xff]
    %v200 = vld [vmem:[#allocation2 + $0x4b8] sm:$0xff]
    %v201 = vld [vmem:[#allocation2 + $0x4c0] sm:$0xff]
    %v202 = vld [vmem:[#allocation2 + $0x4c8] sm:$0xff]
    %v203 = vld [vmem:[#allocation2 + $0x4d0] sm:$0xff]
    %v204 = vld [vmem:[#allocation2 + $0x4d8] sm:$0xff]
    %v205 = vld [vmem:[#allocation2 + $0x4e0] sm:$0xff]
    %v206 = vld [vmem:[#allocation2 + $0x4e8] sm:$0xff]
    %v207 = vld [vmem:[#allocation2 + $0x4f0] sm:$0xff]
    %v208 = vld [vmem:[#allocation2 + $0x4f8] sm:$0xff]
    %v209 = vld [vmem:[#allocation2 + $0x500] sm:$0xff]
    %v210 = vld [vmem:[#allocation2 + $0x508] sm:$0xff]
    %v211 = vld [vmem:[#allocation2 + $0x510] sm:$0xff]
    %v212 = vld [vmem:[#allocation2 + $0x518] sm:$0xff]
    %v213 = vld [vmem:[#allocation2 + $0x520] sm:$0xff]
    %v214 = vld [vmem:[#allocation2 + $0x528] sm:$0xff]
    %v215 = vld [vmem:[#allocation2 + $0x530] sm:$0xff]
    %v216 = vld [vmem:[#allocation2 + $0x538] sm:$0xff]
    %v217 = vld [vmem:[#allocation2 + $0x540] sm:$0xff]
    %v218 = vld [vmem:[#allocation2 + $0x548] sm:$0xff]
    %v219 = vld [vmem:[#allocation2 + $0x550] sm:$0xff]
    %v220 = vld [vmem:[#allocation2 + $0x558] sm:$0xff]
    %v221 = vld [vmem:[#allocation2 + $0x560] sm:$0xff]
    %v222 = vld [vmem:[#allocation2 + $0x568] sm:$0xff]
    %v223 = vld [vmem:[#allocation2 + $0x570] sm:$0xff]
    %v224 = vld [vmem:[#allocation2 + $0x578] sm:$0xff]
    %v225 = vld [vmem:[#allocation2 + $0x580] sm:$0xff]
    %v226 = vld [vmem:[#allocation2 + $0x588] sm:$0xff]
    %v227 = vld [vmem:[#allocation2 + $0x590] sm:$0xff]
    %v228 = vld [vmem:[#allocation2 + $0x598] sm:$0xff]
    %v229 = vld [vmem:[#allocation2 + $0x5a0] sm:$0xff]
    %v230 = vld [vmem:[#allocation2 + $0x5a8] sm:$0xff]
    %v231 = vld [vmem:[#allocation2 + $0x5b0] sm:$0xff]
    %v232 = vld [vmem:[#allocation2 + $0x5b8] sm:$0xff]
    %v233 = vld [vmem:[#allocation2 + $0x5c0] sm:$0xff]
    %v234 = vld [vmem:[#allocation2 + $0x5c8] sm:$0xff]
    %v235 = vld [vmem:[#allocation2 + $0x5d0] sm:$0xff]
    %v236 = vld [vmem:[#allocation2 + $0x5d8] sm:$0xff]
    %v237 = vld [vmem:[#allocation2 + $0x5e0] sm:$0xff]
    %v238 = vld [vmem:[#allocation2 + $0x5e8] sm:$0xff]
    %v239 = vld [vmem:[#allocation2 + $0x5f0] sm:$0xff]
    %v240 = vld [vmem:[#allocation2 + $0x5f8] sm:$0xff]
    %v241 = vld [vmem:[#allocation2 + $0x600] sm:$0xff]
    %v242 = vld [vmem:[#allocation2 + $0x608] sm:$0xff]
    %v243 = vld [vmem:[#allocation2 + $0x610] sm:$0xff]
    %v244 = vld [vmem:[#allocation2 + $0x618] sm:$0xff]
    %v245 = vld [vmem:[#allocation2 + $0x620] sm:$0xff]
    %v246 = vld [vmem:[#allocation2 + $0x628] sm:$0xff]
    %v247 = vld [vmem:[#allocation2 + $0x630] sm:$0xff]
    %v248 = vld [vmem:[#allocation2 + $0x638] sm:$0xff]
    %v249 = vld [vmem:[#allocation2 + $0x640] sm:$0xff]
    %v250 = vld [vmem:[#allocation2 + $0x648] sm:$0xff]
    %v251 = vld [vmem:[#allocation2 + $0x650] sm:$0xff]
    %v252 = vld [vmem:[#allocation2 + $0x658] sm:$0xff]
    %v253 = vld [vmem:[#allocation2 + $0x660] sm:$0xff]
    %v254 = vld [vmem:[#allocation2 + $0x668] sm:$0xff]
    %v255 = vld [vmem:[#allocation2 + $0x670] sm:$0xff]
    %v256 = vld [vmem:[#allocation2 + $0x678] sm:$0xff]
    %v257 = vld [vmem:[#allocation2 + $0x680] sm:$0xff]
    %v258 = vld [vmem:[#allocation2 + $0x688] sm:$0xff]
    %v259 = vld [vmem:[#allocation2 + $0x690] sm:$0xff]
    %v260 = vld [vmem:[#allocation2 + $0x698] sm:$0xff]
    %v261 = vld [vmem:[#allocation2 + $0x6a0] sm:$0xff]
    %v262 = vld [vmem:[#allocation2 + $0x6a8] sm:$0xff]
    %v263 = vld [vmem:[#allocation2 + $0x6b0] sm:$0xff]
    %v264 = vld [vmem:[#allocation2 + $0x6b8] sm:$0xff]
    %v265 = vld [vmem:[#allocation2 + $0x6c0] sm:$0xff]
    %v266 = vld [vmem:[#allocation2 + $0x6c8] sm:$0xff]
    %v267 = vld [vmem:[#allocation2 + $0x6d0] sm:$0xff]
    %v268 = vld [vmem:[#allocation2 + $0x6d8] sm:$0xff]
    %v269 = vld [vmem:[#allocation2 + $0x6e0] sm:$0xff]
    %v270 = vld [vmem:[#allocation2 + $0x6e8] sm:$0xff]
    %v271 = vld [vmem:[#allocation2 + $0x6f0] sm:$0xff]
    %v272 = vld [vmem:[#allocation2 + $0x6f8] sm:$0xff]
    %v273 = vld [vmem:[#allocation2 + $0x700] sm:$0xff]
    %v274 = vld [vmem:[#allocation2 + $0x708] sm:$0xff]
    %v275 = vld [vmem:[#allocation2 + $0x710] sm:$0xff]
    %v276 = vld [vmem:[#allocation2 + $0x718] sm:$0xff]
    %v277 = vld [vmem:[#allocation2 + $0x720] sm:$0xff]
    %v278 = vld [vmem:[#allocation2 + $0x728] sm:$0xff]
    %v279 = vld [vmem:[#allocation2 + $0x730] sm:$0xff]
    %v280 = vld [vmem:[#allocation2 + $0x738] sm:$0xff]
    %v281 = vld [vmem:[#allocation2 + $0x740] sm:$0xff]
    %v282 = vld [vmem:[#allocation2 + $0x748] sm:$0xff]
    %v283 = vld [vmem:[#allocation2 + $0x750] sm:$0xff]
    %v284 = vld [vmem:[#allocation2 + $0x758] sm:$0xff]
    %v285 = vld [vmem:[#allocation2 + $0x760] sm:$0xff]
    %v286 = vld [vmem:[#allocation2 + $0x768] sm:$0xff]
    %v287 = vld [vmem:[#allocation2 + $0x770] sm:$0xff]
    %v288 = vld [vmem:[#allocation2 + $0x778] sm:$0xff]
    %v289 = vld [vmem:[#allocation2 + $0x780] sm:$0xff]
    %v290 = vld [vmem:[#allocation2 + $0x788] sm:$0xff]
    %v291 = vld [vmem:[#allocation2 + $0x790] sm:$0xff]
    %v292 = vld [vmem:[#allocation2 + $0x798] sm:$0xff]
    %v293 = vld [vmem:[#allocation2 + $0x7a0] sm:$0xff]
    %v294 = vld [vmem:[#allocation2 + $0x7a8] sm:$0xff]
    %v295 = vld [vmem:[#allocation2 + $0x7b0] sm:$0xff]
    %v296 = vld [vmem:[#allocation2 + $0x7b8] sm:$0xff]
    %v297 = vld [vmem:[#allocation2 + $0x7c0] sm:$0xff]
    %v298 = vld [vmem:[#allocation2 + $0x7c8] sm:$0xff]
    %v299 = vld [vmem:[#allocation2 + $0x7d0] sm:$0xff]
    %v300 = vld [vmem:[#allocation2 + $0x7d8] sm:$0xff]
    %v301 = vld [vmem:[#allocation2 + $0x7e0] sm:$0xff]
    %v302 = vld [vmem:[#allocation2 + $0x7e8] sm:$0xff]
    %v303 = vld [vmem:[#allocation2 + $0x7f0] sm:$0xff]
    %v304 = vld [vmem:[#allocation2 + $0x7f8] sm:$0xff]
    %v305 = vld [vmem:[%s2] sm:$0xf]
    %v307 = vlaneseq
    %v308 = vshrl.u32 %v307, 7
    %v309 = vsub.s32 0, %v308
    %v310 = vrot.slane %v305, %v309
    %v311 = vlaneseq
    %v312 = vshrl.u32 %v311, 7
    %v313 = vsub.s32 1, %v312
    %v314 = vrot.slane %v305, %v313
    %v315 = vlaneseq
    %v316 = vshrl.u32 %v315, 7
    %v317 = vsub.s32 2, %v316
    %v318 = vrot.slane %v305, %v317
    %v319 = vlaneseq
    %v320 = vshrl.u32 %v319, 7
    %v321 = vsub.s32 3, %v320
    %v322 = vrot.slane %v305, %v321
    %v328 = vcombine.high %v48, %v48
    %v330 = vunpack.c.l.s4 1966171168
    %v331 = vunpack.c.0.s8 %v330
    %v332 = vlaneseq
    %v333 = vshrl.u32 %v332, 7
    %v334 = vsub.s32 %v331, %v333
    %v335 = vrot.slane %v48, %v334
    %v337 = vunpack.c.l.s4 1966171168
    %v338 = vunpack.c.0.s8 %v337
    %v339 = vlaneseq
    %v340 = vshrl.u32 %v339, 7
    %v341 = vsub.s32 %v338, %v340
    %v342 = vrot.slane %v328, %v341
    %v343 = vcombine.high %v335, %v335
    %v344 = vcombine.high %v342, %v342
    %v346 = vunpack.c.l.s4 1966171168
    %v347 = vunpack.c.0.s8 %v346
    %v348 = vlaneseq
    %v349 = vshrl.u32 %v348, 7
    %v350 = vsub.s32 %v347, %v349
    %v351 = vrot.slane %v335, %v350
    %v353 = vunpack.c.l.s4 1966171168
    %v354 = vunpack.c.0.s8 %v353
    %v355 = vlaneseq
    %v356 = vshrl.u32 %v355, 7
    %v357 = vsub.s32 %v354, %v356
    %v358 = vrot.slane %v342, %v357
    %v360 = vunpack.c.l.s4 1966171168
    %v361 = vunpack.c.0.s8 %v360
    %v362 = vlaneseq
    %v363 = vshrl.u32 %v362, 7
    %v364 = vsub.s32 %v361, %v363
    %v365 = vrot.slane %v343, %v364
    %v367 = vunpack.c.l.s4 1966171168
    %v368 = vunpack.c.0.s8 %v367
    %v369 = vlaneseq
    %v370 = vshrl.u32 %v369, 7
    %v371 = vsub.s32 %v368, %v370
    %v372 = vrot.slane %v344, %v371
    %v373 = vcombine.high %v351, %v351
    %v374 = vcombine.high %v358, %v358
    %v375 = vcombine.high %v365, %v365
    %v376 = vcombine.high %v372, %v372
    %v641 = vunpack.c.l.b16 %v49
    %v642 = vunpack.c.h.b16 %v49
    %v643 = vunpack.c.l.b16 %v50
    %v644 = vunpack.c.h.b16 %v50
    %v645 = vunpack.c.l.b16 %v51
    %v646 = vunpack.c.h.b16 %v51
    %v647 = vunpack.c.l.b16 %v52
    %v648 = vunpack.c.h.b16 %v52
    %v649 = vunpack.c.l.b16 %v53
    %v650 = vunpack.c.h.b16 %v53
    %v651 = vunpack.c.l.b16 %v54
    %v652 = vunpack.c.h.b16 %v54
    %v653 = vunpack.c.l.b16 %v55
    %v654 = vunpack.c.h.b16 %v55
    %v655 = vunpack.c.l.b16 %v56
    %v656 = vunpack.c.h.b16 %v56
    %v657 = vunpack.c.l.b16 %v57
    %v658 = vunpack.c.h.b16 %v57
    %v659 = vunpack.c.l.b16 %v58
    %v660 = vunpack.c.h.b16 %v58
    %v661 = vunpack.c.l.b16 %v59
    %v662 = vunpack.c.h.b16 %v59
    %v663 = vunpack.c.l.b16 %v60
    %v664 = vunpack.c.h.b16 %v60
    %v665 = vunpack.c.l.b16 %v61
    %v666 = vunpack.c.h.b16 %v61
    %v667 = vunpack.c.l.b16 %v62
    %v668 = vunpack.c.h.b16 %v62
    %v669 = vunpack.c.l.b16 %v63
    %v670 = vunpack.c.h.b16 %v63
    %v671 = vunpack.c.l.b16 %v64
    %v672 = vunpack.c.h.b16 %v64
    %v673 = vunpack.c.l.b16 %v65
    %v674 = vunpack.c.h.b16 %v65
    %v675 = vunpack.c.l.b16 %v66
    %v676 = vunpack.c.h.b16 %v66
    %v677 = vunpack.c.l.b16 %v67
    %v678 = vunpack.c.h.b16 %v67
    %v679 = vunpack.c.l.b16 %v68
    %v680 = vunpack.c.h.b16 %v68
    %v681 = vunpack.c.l.b16 %v69
    %v682 = vunpack.c.h.b16 %v69
    %v683 = vunpack.c.l.b16 %v70
    %v684 = vunpack.c.h.b16 %v70
    %v685 = vunpack.c.l.b16 %v71
    %v686 = vunpack.c.h.b16 %v71
    %v687 = vunpack.c.l.b16 %v72
    %v688 = vunpack.c.h.b16 %v72
    %v689 = vunpack.c.l.b16 %v73
    %v690 = vunpack.c.h.b16 %v73
    %v691 = vunpack.c.l.b16 %v74
    %v692 = vunpack.c.h.b16 %v74
    %v693 = vunpack.c.l.b16 %v75
    %v694 = vunpack.c.h.b16 %v75
    %v695 = vunpack.c.l.b16 %v76
    %v696 = vunpack.c.h.b16 %v76
    %v697 = vunpack.c.l.b16 %v77
    %v698 = vunpack.c.h.b16 %v77
    %v699 = vunpack.c.l.b16 %v78
    %v700 = vunpack.c.h.b16 %v78
    %v701 = vunpack.c.l.b16 %v79
    %v702 = vunpack.c.h.b16 %v79
    %v703 = vunpack.c.l.b16 %v80
    %v704 = vunpack.c.h.b16 %v80
    %v705 = vunpack.c.l.b16 %v81
    %v706 = vunpack.c.h.b16 %v81
    %v707 = vunpack.c.l.b16 %v82
    %v708 = vunpack.c.h.b16 %v82
    %v709 = vunpack.c.l.b16 %v83
    %v710 = vunpack.c.h.b16 %v83
    %v711 = vunpack.c.l.b16 %v84
    %v712 = vunpack.c.h.b16 %v84
    %v713 = vunpack.c.l.b16 %v85
    %v714 = vunpack.c.h.b16 %v85
    %v715 = vunpack.c.l.b16 %v86
    %v716 = vunpack.c.h.b16 %v86
    %v717 = vunpack.c.l.b16 %v87
    %v718 = vunpack.c.h.b16 %v87
    %v719 = vunpack.c.l.b16 %v88
    %v720 = vunpack.c.h.b16 %v88
    %v721 = vunpack.c.l.b16 %v89
    %v722 = vunpack.c.h.b16 %v89
    %v723 = vunpack.c.l.b16 %v90
    %v724 = vunpack.c.h.b16 %v90
    %v725 = vunpack.c.l.b16 %v91
    %v726 = vunpack.c.h.b16 %v91
    %v727 = vunpack.c.l.b16 %v92
    %v728 = vunpack.c.h.b16 %v92
    %v729 = vunpack.c.l.b16 %v93
    %v730 = vunpack.c.h.b16 %v93
    %v731 = vunpack.c.l.b16 %v94
    %v732 = vunpack.c.h.b16 %v94
    %v733 = vunpack.c.l.b16 %v95
    %v734 = vunpack.c.h.b16 %v95
    %v735 = vunpack.c.l.b16 %v96
    %v736 = vunpack.c.h.b16 %v96
    %v737 = vunpack.c.l.b16 %v97
    %v738 = vunpack.c.h.b16 %v97
    %v739 = vunpack.c.l.b16 %v98
    %v740 = vunpack.c.h.b16 %v98
    %v741 = vunpack.c.l.b16 %v99
    %v742 = vunpack.c.h.b16 %v99
    %v743 = vunpack.c.l.b16 %v100
    %v744 = vunpack.c.h.b16 %v100
    %v745 = vunpack.c.l.b16 %v101
    %v746 = vunpack.c.h.b16 %v101
    %v747 = vunpack.c.l.b16 %v102
    %v748 = vunpack.c.h.b16 %v102
    %v749 = vunpack.c.l.b16 %v103
    %v750 = vunpack.c.h.b16 %v103
    %v751 = vunpack.c.l.b16 %v104
    %v752 = vunpack.c.h.b16 %v104
    %v753 = vunpack.c.l.b16 %v105
    %v754 = vunpack.c.h.b16 %v105
    %v755 = vunpack.c.l.b16 %v106
    %v756 = vunpack.c.h.b16 %v106
    %v757 = vunpack.c.l.b16 %v107
    %v758 = vunpack.c.h.b16 %v107
    %v759 = vunpack.c.l.b16 %v108
    %v760 = vunpack.c.h.b16 %v108
    %v761 = vunpack.c.l.b16 %v109
    %v762 = vunpack.c.h.b16 %v109
    %v763 = vunpack.c.l.b16 %v110
    %v764 = vunpack.c.h.b16 %v110
    %v765 = vunpack.c.l.b16 %v111
    %v766 = vunpack.c.h.b16 %v111
    %v767 = vunpack.c.l.b16 %v112
    %v768 = vunpack.c.h.b16 %v112
    %v769 = vunpack.c.l.b16 %v113
    %v770 = vunpack.c.h.b16 %v113
    %v771 = vunpack.c.l.b16 %v114
    %v772 = vunpack.c.h.b16 %v114
    %v773 = vunpack.c.l.b16 %v115
    %v774 = vunpack.c.h.b16 %v115
    %v775 = vunpack.c.l.b16 %v116
    %v776 = vunpack.c.h.b16 %v116
    %v777 = vunpack.c.l.b16 %v117
    %v778 = vunpack.c.h.b16 %v117
    %v779 = vunpack.c.l.b16 %v118
    %v780 = vunpack.c.h.b16 %v118
    %v781 = vunpack.c.l.b16 %v119
    %v782 = vunpack.c.h.b16 %v119
    %v783 = vunpack.c.l.b16 %v120
    %v784 = vunpack.c.h.b16 %v120
    %v785 = vunpack.c.l.b16 %v121
    %v786 = vunpack.c.h.b16 %v121
    %v787 = vunpack.c.l.b16 %v122
    %v788 = vunpack.c.h.b16 %v122
    %v789 = vunpack.c.l.b16 %v123
    %v790 = vunpack.c.h.b16 %v123
    %v791 = vunpack.c.l.b16 %v124
    %v792 = vunpack.c.h.b16 %v124
    %v793 = vunpack.c.l.b16 %v125
    %v794 = vunpack.c.h.b16 %v125
    %v795 = vunpack.c.l.b16 %v126
    %v796 = vunpack.c.h.b16 %v126
    %v797 = vunpack.c.l.b16 %v127
    %v798 = vunpack.c.h.b16 %v127
    %v799 = vunpack.c.l.b16 %v128
    %v800 = vunpack.c.h.b16 %v128
    %v801 = vunpack.c.l.b16 %v129
    %v802 = vunpack.c.h.b16 %v129
    %v803 = vunpack.c.l.b16 %v130
    %v804 = vunpack.c.h.b16 %v130
    %v805 = vunpack.c.l.b16 %v131
    %v806 = vunpack.c.h.b16 %v131
    %v807 = vunpack.c.l.b16 %v132
    %v808 = vunpack.c.h.b16 %v132
    %v809 = vunpack.c.l.b16 %v133
    %v810 = vunpack.c.h.b16 %v133
    %v811 = vunpack.c.l.b16 %v134
    %v812 = vunpack.c.h.b16 %v134
    %v813 = vunpack.c.l.b16 %v135
    %v814 = vunpack.c.h.b16 %v135
    %v815 = vunpack.c.l.b16 %v136
    %v816 = vunpack.c.h.b16 %v136
    %v817 = vunpack.c.l.b16 %v137
    %v818 = vunpack.c.h.b16 %v137
    %v819 = vunpack.c.l.b16 %v138
    %v820 = vunpack.c.h.b16 %v138
    %v821 = vunpack.c.l.b16 %v139
    %v822 = vunpack.c.h.b16 %v139
    %v823 = vunpack.c.l.b16 %v140
    %v824 = vunpack.c.h.b16 %v140
    %v825 = vunpack.c.l.b16 %v141
    %v826 = vunpack.c.h.b16 %v141
    %v827 = vunpack.c.l.b16 %v142
    %v828 = vunpack.c.h.b16 %v142
    %v829 = vunpack.c.l.b16 %v143
    %v830 = vunpack.c.h.b16 %v143
    %v831 = vunpack.c.l.b16 %v144
    %v832 = vunpack.c.h.b16 %v144
    %v833 = vunpack.c.l.b16 %v145
    %v834 = vunpack.c.h.b16 %v145
    %v835 = vunpack.c.l.b16 %v146
    %v836 = vunpack.c.h.b16 %v146
    %v837 = vunpack.c.l.b16 %v147
    %v838 = vunpack.c.h.b16 %v147
    %v839 = vunpack.c.l.b16 %v148
    %v840 = vunpack.c.h.b16 %v148
    %v841 = vunpack.c.l.b16 %v149
    %v842 = vunpack.c.h.b16 %v149
    %v843 = vunpack.c.l.b16 %v150
    %v844 = vunpack.c.h.b16 %v150
    %v845 = vunpack.c.l.b16 %v151
    %v846 = vunpack.c.h.b16 %v151
    %v847 = vunpack.c.l.b16 %v152
    %v848 = vunpack.c.h.b16 %v152
    %v849 = vunpack.c.l.b16 %v153
    %v850 = vunpack.c.h.b16 %v153
    %v851 = vunpack.c.l.b16 %v154
    %v852 = vunpack.c.h.b16 %v154
    %v853 = vunpack.c.l.b16 %v155
    %v854 = vunpack.c.h.b16 %v155
    %v855 = vunpack.c.l.b16 %v156
    %v856 = vunpack.c.h.b16 %v156
    %v857 = vunpack.c.l.b16 %v157
    %v858 = vunpack.c.h.b16 %v157
    %v859 = vunpack.c.l.b16 %v158
    %v860 = vunpack.c.h.b16 %v158
    %v861 = vunpack.c.l.b16 %v159
    %v862 = vunpack.c.h.b16 %v159
    %v863 = vunpack.c.l.b16 %v160
    %v864 = vunpack.c.h.b16 %v160
    %v865 = vunpack.c.l.b16 %v161
    %v866 = vunpack.c.h.b16 %v161
    %v867 = vunpack.c.l.b16 %v162
    %v868 = vunpack.c.h.b16 %v162
    %v869 = vunpack.c.l.b16 %v163
    %v870 = vunpack.c.h.b16 %v163
    %v871 = vunpack.c.l.b16 %v164
    %v872 = vunpack.c.h.b16 %v164
    %v873 = vunpack.c.l.b16 %v165
    %v874 = vunpack.c.h.b16 %v165
    %v875 = vunpack.c.l.b16 %v166
    %v876 = vunpack.c.h.b16 %v166
    %v877 = vunpack.c.l.b16 %v167
    %v878 = vunpack.c.h.b16 %v167
    %v879 = vunpack.c.l.b16 %v168
    %v880 = vunpack.c.h.b16 %v168
    %v881 = vunpack.c.l.b16 %v169
    %v882 = vunpack.c.h.b16 %v169
    %v883 = vunpack.c.l.b16 %v170
    %v884 = vunpack.c.h.b16 %v170
    %v885 = vunpack.c.l.b16 %v171
    %v886 = vunpack.c.h.b16 %v171
    %v887 = vunpack.c.l.b16 %v172
    %v888 = vunpack.c.h.b16 %v172
    %v889 = vunpack.c.l.b16 %v173
    %v890 = vunpack.c.h.b16 %v173
    %v891 = vunpack.c.l.b16 %v174
    %v892 = vunpack.c.h.b16 %v174
    %v893 = vunpack.c.l.b16 %v175
    %v894 = vunpack.c.h.b16 %v175
    %v895 = vunpack.c.l.b16 %v176
    %v896 = vunpack.c.h.b16 %v176
    %v897 = vunpack.c.l.b16 %v177
    %v898 = vunpack.c.h.b16 %v177
    %v899 = vunpack.c.l.b16 %v178
    %v900 = vunpack.c.h.b16 %v178
    %v901 = vunpack.c.l.b16 %v179
    %v902 = vunpack.c.h.b16 %v179
    %v903 = vunpack.c.l.b16 %v180
    %v904 = vunpack.c.h.b16 %v180
    %v905 = vunpack.c.l.b16 %v181
    %v906 = vunpack.c.h.b16 %v181
    %v907 = vunpack.c.l.b16 %v182
    %v908 = vunpack.c.h.b16 %v182
    %v909 = vunpack.c.l.b16 %v183
    %v910 = vunpack.c.h.b16 %v183
    %v911 = vunpack.c.l.b16 %v184
    %v912 = vunpack.c.h.b16 %v184
    %v913 = vunpack.c.l.b16 %v185
    %v914 = vunpack.c.h.b16 %v185
    %v915 = vunpack.c.l.b16 %v186
    %v916 = vunpack.c.h.b16 %v186
    %v917 = vunpack.c.l.b16 %v187
    %v918 = vunpack.c.h.b16 %v187
    %v919 = vunpack.c.l.b16 %v188
    %v920 = vunpack.c.h.b16 %v188
    %v921 = vunpack.c.l.b16 %v189
    %v922 = vunpack.c.h.b16 %v189
    %v923 = vunpack.c.l.b16 %v190
    %v924 = vunpack.c.h.b16 %v190
    %v925 = vunpack.c.l.b16 %v191
    %v926 = vunpack.c.h.b16 %v191
    %v927 = vunpack.c.l.b16 %v192
    %v928 = vunpack.c.h.b16 %v192
    %v929 = vunpack.c.l.b16 %v193
    %v930 = vunpack.c.h.b16 %v193
    %v931 = vunpack.c.l.b16 %v194
    %v932 = vunpack.c.h.b16 %v194
    %v933 = vunpack.c.l.b16 %v195
    %v934 = vunpack.c.h.b16 %v195
    %v935 = vunpack.c.l.b16 %v196
    %v936 = vunpack.c.h.b16 %v196
    %v937 = vunpack.c.l.b16 %v197
    %v938 = vunpack.c.h.b16 %v197
    %v939 = vunpack.c.l.b16 %v198
    %v940 = vunpack.c.h.b16 %v198
    %v941 = vunpack.c.l.b16 %v199
    %v942 = vunpack.c.h.b16 %v199
    %v943 = vunpack.c.l.b16 %v200
    %v944 = vunpack.c.h.b16 %v200
    %v945 = vunpack.c.l.b16 %v201
    %v946 = vunpack.c.h.b16 %v201
    %v947 = vunpack.c.l.b16 %v202
    %v948 = vunpack.c.h.b16 %v202
    %v949 = vunpack.c.l.b16 %v203
    %v950 = vunpack.c.h.b16 %v203
    %v951 = vunpack.c.l.b16 %v204
    %v952 = vunpack.c.h.b16 %v204
    %v953 = vunpack.c.l.b16 %v205
    %v954 = vunpack.c.h.b16 %v205
    %v955 = vunpack.c.l.b16 %v206
    %v956 = vunpack.c.h.b16 %v206
    %v957 = vunpack.c.l.b16 %v207
    %v958 = vunpack.c.h.b16 %v207
    %v959 = vunpack.c.l.b16 %v208
    %v960 = vunpack.c.h.b16 %v208
    %v961 = vunpack.c.l.b16 %v209
    %v962 = vunpack.c.h.b16 %v209
    %v963 = vunpack.c.l.b16 %v210
    %v964 = vunpack.c.h.b16 %v210
    %v965 = vunpack.c.l.b16 %v211
    %v966 = vunpack.c.h.b16 %v211
    %v967 = vunpack.c.l.b16 %v212
    %v968 = vunpack.c.h.b16 %v212
    %v969 = vunpack.c.l.b16 %v213
    %v970 = vunpack.c.h.b16 %v213
    %v971 = vunpack.c.l.b16 %v214
    %v972 = vunpack.c.h.b16 %v214
    %v973 = vunpack.c.l.b16 %v215
    %v974 = vunpack.c.h.b16 %v215
    %v975 = vunpack.c.l.b16 %v216
    %v976 = vunpack.c.h.b16 %v216
    %v977 = vunpack.c.l.b16 %v217
    %v978 = vunpack.c.h.b16 %v217
    %v979 = vunpack.c.l.b16 %v218
    %v980 = vunpack.c.h.b16 %v218
    %v981 = vunpack.c.l.b16 %v219
    %v982 = vunpack.c.h.b16 %v219
    %v983 = vunpack.c.l.b16 %v220
    %v984 = vunpack.c.h.b16 %v220
    %v985 = vunpack.c.l.b16 %v221
    %v986 = vunpack.c.h.b16 %v221
    %v987 = vunpack.c.l.b16 %v222
    %v988 = vunpack.c.h.b16 %v222
    %v989 = vunpack.c.l.b16 %v223
    %v990 = vunpack.c.h.b16 %v223
    %v991 = vunpack.c.l.b16 %v224
    %v992 = vunpack.c.h.b16 %v224
    %v993 = vunpack.c.l.b16 %v225
    %v994 = vunpack.c.h.b16 %v225
    %v995 = vunpack.c.l.b16 %v226
    %v996 = vunpack.c.h.b16 %v226
    %v997 = vunpack.c.l.b16 %v227
    %v998 = vunpack.c.h.b16 %v227
    %v999 = vunpack.c.l.b16 %v228
    %v1000 = vunpack.c.h.b16 %v228
    %v1001 = vunpack.c.l.b16 %v229
    %v1002 = vunpack.c.h.b16 %v229
    %v1003 = vunpack.c.l.b16 %v230
    %v1004 = vunpack.c.h.b16 %v230
    %v1005 = vunpack.c.l.b16 %v231
    %v1006 = vunpack.c.h.b16 %v231
    %v1007 = vunpack.c.l.b16 %v232
    %v1008 = vunpack.c.h.b16 %v232
    %v1009 = vunpack.c.l.b16 %v233
    %v1010 = vunpack.c.h.b16 %v233
    %v1011 = vunpack.c.l.b16 %v234
    %v1012 = vunpack.c.h.b16 %v234
    %v1013 = vunpack.c.l.b16 %v235
    %v1014 = vunpack.c.h.b16 %v235
    %v1015 = vunpack.c.l.b16 %v236
    %v1016 = vunpack.c.h.b16 %v236
    %v1017 = vunpack.c.l.b16 %v237
    %v1018 = vunpack.c.h.b16 %v237
    %v1019 = vunpack.c.l.b16 %v238
    %v1020 = vunpack.c.h.b16 %v238
    %v1021 = vunpack.c.l.b16 %v239
    %v1022 = vunpack.c.h.b16 %v239
    %v1023 = vunpack.c.l.b16 %v240
    %v1024 = vunpack.c.h.b16 %v240
    %v1025 = vunpack.c.l.b16 %v241
    %v1026 = vunpack.c.h.b16 %v241
    %v1027 = vunpack.c.l.b16 %v242
    %v1028 = vunpack.c.h.b16 %v242
    %v1029 = vunpack.c.l.b16 %v243
    %v1030 = vunpack.c.h.b16 %v243
    %v1031 = vunpack.c.l.b16 %v244
    %v1032 = vunpack.c.h.b16 %v244
    %v1033 = vunpack.c.l.b16 %v245
    %v1034 = vunpack.c.h.b16 %v245
    %v1035 = vunpack.c.l.b16 %v246
    %v1036 = vunpack.c.h.b16 %v246
    %v1037 = vunpack.c.l.b16 %v247
    %v1038 = vunpack.c.h.b16 %v247
    %v1039 = vunpack.c.l.b16 %v248
    %v1040 = vunpack.c.h.b16 %v248
    %v1041 = vunpack.c.l.b16 %v249
    %v1042 = vunpack.c.h.b16 %v249
    %v1043 = vunpack.c.l.b16 %v250
    %v1044 = vunpack.c.h.b16 %v250
    %v1045 = vunpack.c.l.b16 %v251
    %v1046 = vunpack.c.h.b16 %v251
    %v1047 = vunpack.c.l.b16 %v252
    %v1048 = vunpack.c.h.b16 %v252
    %v1049 = vunpack.c.l.b16 %v253
    %v1050 = vunpack.c.h.b16 %v253
    %v1051 = vunpack.c.l.b16 %v254
    %v1052 = vunpack.c.h.b16 %v254
    %v1053 = vunpack.c.l.b16 %v255
    %v1054 = vunpack.c.h.b16 %v255
    %v1055 = vunpack.c.l.b16 %v256
    %v1056 = vunpack.c.h.b16 %v256
    %v1057 = vunpack.c.l.b16 %v257
    %v1058 = vunpack.c.h.b16 %v257
    %v1059 = vunpack.c.l.b16 %v258
    %v1060 = vunpack.c.h.b16 %v258
    %v1061 = vunpack.c.l.b16 %v259
    %v1062 = vunpack.c.h.b16 %v259
    %v1063 = vunpack.c.l.b16 %v260
    %v1064 = vunpack.c.h.b16 %v260
    %v1065 = vunpack.c.l.b16 %v261
    %v1066 = vunpack.c.h.b16 %v261
    %v1067 = vunpack.c.l.b16 %v262
    %v1068 = vunpack.c.h.b16 %v262
    %v1069 = vunpack.c.l.b16 %v263
    %v1070 = vunpack.c.h.b16 %v263
    %v1071 = vunpack.c.l.b16 %v264
    %v1072 = vunpack.c.h.b16 %v264
    %v1073 = vunpack.c.l.b16 %v265
    %v1074 = vunpack.c.h.b16 %v265
    %v1075 = vunpack.c.l.b16 %v266
    %v1076 = vunpack.c.h.b16 %v266
    %v1077 = vunpack.c.l.b16 %v267
    %v1078 = vunpack.c.h.b16 %v267
    %v1079 = vunpack.c.l.b16 %v268
    %v1080 = vunpack.c.h.b16 %v268
    %v1081 = vunpack.c.l.b16 %v269
    %v1082 = vunpack.c.h.b16 %v269
    %v1083 = vunpack.c.l.b16 %v270
    %v1084 = vunpack.c.h.b16 %v270
    %v1085 = vunpack.c.l.b16 %v271
    %v1086 = vunpack.c.h.b16 %v271
    %v1087 = vunpack.c.l.b16 %v272
    %v1088 = vunpack.c.h.b16 %v272
    %v1089 = vunpack.c.l.b16 %v273
    %v1090 = vunpack.c.h.b16 %v273
    %v1091 = vunpack.c.l.b16 %v274
    %v1092 = vunpack.c.h.b16 %v274
    %v1093 = vunpack.c.l.b16 %v275
    %v1094 = vunpack.c.h.b16 %v275
    %v1095 = vunpack.c.l.b16 %v276
    %v1096 = vunpack.c.h.b16 %v276
    %v1097 = vunpack.c.l.b16 %v277
    %v1098 = vunpack.c.h.b16 %v277
    %v1099 = vunpack.c.l.b16 %v278
    %v1100 = vunpack.c.h.b16 %v278
    %v1101 = vunpack.c.l.b16 %v279
    %v1102 = vunpack.c.h.b16 %v279
    %v1103 = vunpack.c.l.b16 %v280
    %v1104 = vunpack.c.h.b16 %v280
    %v1105 = vunpack.c.l.b16 %v281
    %v1106 = vunpack.c.h.b16 %v281
    %v1107 = vunpack.c.l.b16 %v282
    %v1108 = vunpack.c.h.b16 %v282
    %v1109 = vunpack.c.l.b16 %v283
    %v1110 = vunpack.c.h.b16 %v283
    %v1111 = vunpack.c.l.b16 %v284
    %v1112 = vunpack.c.h.b16 %v284
    %v1113 = vunpack.c.l.b16 %v285
    %v1114 = vunpack.c.h.b16 %v285
    %v1115 = vunpack.c.l.b16 %v286
    %v1116 = vunpack.c.h.b16 %v286
    %v1117 = vunpack.c.l.b16 %v287
    %v1118 = vunpack.c.h.b16 %v287
    %v1119 = vunpack.c.l.b16 %v288
    %v1120 = vunpack.c.h.b16 %v288
    %v1121 = vunpack.c.l.b16 %v289
    %v1122 = vunpack.c.h.b16 %v289
    %v1123 = vunpack.c.l.b16 %v290
    %v1124 = vunpack.c.h.b16 %v290
    %v1125 = vunpack.c.l.b16 %v291
    %v1126 = vunpack.c.h.b16 %v291
    %v1127 = vunpack.c.l.b16 %v292
    %v1128 = vunpack.c.h.b16 %v292
    %v1129 = vunpack.c.l.b16 %v293
    %v1130 = vunpack.c.h.b16 %v293
    %v1131 = vunpack.c.l.b16 %v294
    %v1132 = vunpack.c.h.b16 %v294
    %v1133 = vunpack.c.l.b16 %v295
    %v1134 = vunpack.c.h.b16 %v295
    %v1135 = vunpack.c.l.b16 %v296
    %v1136 = vunpack.c.h.b16 %v296
    %v1137 = vunpack.c.l.b16 %v297
    %v1138 = vunpack.c.h.b16 %v297
    %v1139 = vunpack.c.l.b16 %v298
    %v1140 = vunpack.c.h.b16 %v298
    %v1141 = vunpack.c.l.b16 %v299
    %v1142 = vunpack.c.h.b16 %v299
    %v1143 = vunpack.c.l.b16 %v300
    %v1144 = vunpack.c.h.b16 %v300
    %v1145 = vunpack.c.l.b16 %v301
    %v1146 = vunpack.c.h.b16 %v301
    %v1147 = vunpack.c.l.b16 %v302
    %v1148 = vunpack.c.h.b16 %v302
    %v1149 = vunpack.c.l.b16 %v303
    %v1150 = vunpack.c.h.b16 %v303
    %v1151 = vunpack.c.l.b16 %v304
    %v1152 = vunpack.c.h.b16 %v304
    %v1153 = vpack.c.b16 %v645, %v641
    %v1154 = vpack.c.b16 %v646, %v642
    %v1155 = vpack.c.b16 %v647, %v643
    %v1156 = vpack.c.b16 %v648, %v644
    %v1157 = vpack.c.b16 %v653, %v649
    %v1158 = vpack.c.b16 %v654, %v650
    %v1159 = vpack.c.b16 %v655, %v651
    %v1160 = vpack.c.b16 %v656, %v652
    %v1161 = vpack.c.b16 %v661, %v657
    %v1162 = vpack.c.b16 %v662, %v658
    %v1163 = vpack.c.b16 %v663, %v659
    %v1164 = vpack.c.b16 %v664, %v660
    %v1165 = vpack.c.b16 %v669, %v665
    %v1166 = vpack.c.b16 %v670, %v666
    %v1167 = vpack.c.b16 %v671, %v667
    %v1168 = vpack.c.b16 %v672, %v668
    %v1169 = vpack.c.b16 %v677, %v673
    %v1170 = vpack.c.b16 %v678, %v674
    %v1171 = vpack.c.b16 %v679, %v675
    %v1172 = vpack.c.b16 %v680, %v676
    %v1173 = vpack.c.b16 %v685, %v681
    %v1174 = vpack.c.b16 %v686, %v682
    %v1175 = vpack.c.b16 %v687, %v683
    %v1176 = vpack.c.b16 %v688, %v684
    %v1177 = vpack.c.b16 %v693, %v689
    %v1178 = vpack.c.b16 %v694, %v690
    %v1179 = vpack.c.b16 %v695, %v691
    %v1180 = vpack.c.b16 %v696, %v692
    %v1181 = vpack.c.b16 %v701, %v697
    %v1182 = vpack.c.b16 %v702, %v698
    %v1183 = vpack.c.b16 %v703, %v699
    %v1184 = vpack.c.b16 %v704, %v700
    %v1185 = vpack.c.b16 %v709, %v705
    %v1186 = vpack.c.b16 %v710, %v706
    %v1187 = vpack.c.b16 %v711, %v707
    %v1188 = vpack.c.b16 %v712, %v708
    %v1189 = vpack.c.b16 %v717, %v713
    %v1190 = vpack.c.b16 %v718, %v714
    %v1191 = vpack.c.b16 %v719, %v715
    %v1192 = vpack.c.b16 %v720, %v716
    %v1193 = vpack.c.b16 %v725, %v721
    %v1194 = vpack.c.b16 %v726, %v722
    %v1195 = vpack.c.b16 %v727, %v723
    %v1196 = vpack.c.b16 %v728, %v724
    %v1197 = vpack.c.b16 %v733, %v729
    %v1198 = vpack.c.b16 %v734, %v730
    %v1199 = vpack.c.b16 %v735, %v731
    %v1200 = vpack.c.b16 %v736, %v732
    %v1201 = vpack.c.b16 %v741, %v737
    %v1202 = vpack.c.b16 %v742, %v738
    %v1203 = vpack.c.b16 %v743, %v739
    %v1204 = vpack.c.b16 %v744, %v740
    %v1205 = vpack.c.b16 %v749, %v745
    %v1206 = vpack.c.b16 %v750, %v746
    %v1207 = vpack.c.b16 %v751, %v747
    %v1208 = vpack.c.b16 %v752, %v748
    %v1209 = vpack.c.b16 %v757, %v753
    %v1210 = vpack.c.b16 %v758, %v754
    %v1211 = vpack.c.b16 %v759, %v755
    %v1212 = vpack.c.b16 %v760, %v756
    %v1213 = vpack.c.b16 %v765, %v761
    %v1214 = vpack.c.b16 %v766, %v762
    %v1215 = vpack.c.b16 %v767, %v763
    %v1216 = vpack.c.b16 %v768, %v764
    %v1217 = vpack.c.b16 %v773, %v769
    %v1218 = vpack.c.b16 %v774, %v770
    %v1219 = vpack.c.b16 %v775, %v771
    %v1220 = vpack.c.b16 %v776, %v772
    %v1221 = vpack.c.b16 %v781, %v777
    %v1222 = vpack.c.b16 %v782, %v778
    %v1223 = vpack.c.b16 %v783, %v779
    %v1224 = vpack.c.b16 %v784, %v780
    %v1225 = vpack.c.b16 %v789, %v785
    %v1226 = vpack.c.b16 %v790, %v786
    %v1227 = vpack.c.b16 %v791, %v787
    %v1228 = vpack.c.b16 %v792, %v788
    %v1229 = vpack.c.b16 %v797, %v793
    %v1230 = vpack.c.b16 %v798, %v794
    %v1231 = vpack.c.b16 %v799, %v795
    %v1232 = vpack.c.b16 %v800, %v796
    %v1233 = vpack.c.b16 %v805, %v801
    %v1234 = vpack.c.b16 %v806, %v802
    %v1235 = vpack.c.b16 %v807, %v803
    %v1236 = vpack.c.b16 %v808, %v804
    %v1237 = vpack.c.b16 %v813, %v809
    %v1238 = vpack.c.b16 %v814, %v810
    %v1239 = vpack.c.b16 %v815, %v811
    %v1240 = vpack.c.b16 %v816, %v812
    %v1241 = vpack.c.b16 %v821, %v817
    %v1242 = vpack.c.b16 %v822, %v818
    %v1243 = vpack.c.b16 %v823, %v819
    %v1244 = vpack.c.b16 %v824, %v820
    %v1245 = vpack.c.b16 %v829, %v825
    %v1246 = vpack.c.b16 %v830, %v826
    %v1247 = vpack.c.b16 %v831, %v827
    %v1248 = vpack.c.b16 %v832, %v828
    %v1249 = vpack.c.b16 %v837, %v833
    %v1250 = vpack.c.b16 %v838, %v834
    %v1251 = vpack.c.b16 %v839, %v835
    %v1252 = vpack.c.b16 %v840, %v836
    %v1253 = vpack.c.b16 %v845, %v841
    %v1254 = vpack.c.b16 %v846, %v842
    %v1255 = vpack.c.b16 %v847, %v843
    %v1256 = vpack.c.b16 %v848, %v844
    %v1257 = vpack.c.b16 %v853, %v849
    %v1258 = vpack.c.b16 %v854, %v850
    %v1259 = vpack.c.b16 %v855, %v851
    %v1260 = vpack.c.b16 %v856, %v852
    %v1261 = vpack.c.b16 %v861, %v857
    %v1262 = vpack.c.b16 %v862, %v858
    %v1263 = vpack.c.b16 %v863, %v859
    %v1264 = vpack.c.b16 %v864, %v860
    %v1265 = vpack.c.b16 %v869, %v865
    %v1266 = vpack.c.b16 %v870, %v866
    %v1267 = vpack.c.b16 %v871, %v867
    %v1268 = vpack.c.b16 %v872, %v868
    %v1269 = vpack.c.b16 %v877, %v873
    %v1270 = vpack.c.b16 %v878, %v874
    %v1271 = vpack.c.b16 %v879, %v875
    %v1272 = vpack.c.b16 %v880, %v876
    %v1273 = vpack.c.b16 %v885, %v881
    %v1274 = vpack.c.b16 %v886, %v882
    %v1275 = vpack.c.b16 %v887, %v883
    %v1276 = vpack.c.b16 %v888, %v884
    %v1277 = vpack.c.b16 %v893, %v889
    %v1278 = vpack.c.b16 %v894, %v890
    %v1279 = vpack.c.b16 %v895, %v891
    %v1280 = vpack.c.b16 %v896, %v892
    %v1281 = vpack.c.b16 %v901, %v897
    %v1282 = vpack.c.b16 %v902, %v898
    %v1283 = vpack.c.b16 %v903, %v899
    %v1284 = vpack.c.b16 %v904, %v900
    %v1285 = vpack.c.b16 %v909, %v905
    %v1286 = vpack.c.b16 %v910, %v906
    %v1287 = vpack.c.b16 %v911, %v907
    %v1288 = vpack.c.b16 %v912, %v908
    %v1289 = vpack.c.b16 %v917, %v913
    %v1290 = vpack.c.b16 %v918, %v914
    %v1291 = vpack.c.b16 %v919, %v915
    %v1292 = vpack.c.b16 %v920, %v916
    %v1293 = vpack.c.b16 %v925, %v921
    %v1294 = vpack.c.b16 %v926, %v922
    %v1295 = vpack.c.b16 %v927, %v923
    %v1296 = vpack.c.b16 %v928, %v924
    %v1297 = vpack.c.b16 %v933, %v929
    %v1298 = vpack.c.b16 %v934, %v930
    %v1299 = vpack.c.b16 %v935, %v931
    %v1300 = vpack.c.b16 %v936, %v932
    %v1301 = vpack.c.b16 %v941, %v937
    %v1302 = vpack.c.b16 %v942, %v938
    %v1303 = vpack.c.b16 %v943, %v939
    %v1304 = vpack.c.b16 %v944, %v940
    %v1305 = vpack.c.b16 %v949, %v945
    %v1306 = vpack.c.b16 %v950, %v946
    %v1307 = vpack.c.b16 %v951, %v947
    %v1308 = vpack.c.b16 %v952, %v948
    %v1309 = vpack.c.b16 %v957, %v953
    %v1310 = vpack.c.b16 %v958, %v954
    %v1311 = vpack.c.b16 %v959, %v955
    %v1312 = vpack.c.b16 %v960, %v956
    %v1313 = vpack.c.b16 %v965, %v961
    %v1314 = vpack.c.b16 %v966, %v962
    %v1315 = vpack.c.b16 %v967, %v963
    %v1316 = vpack.c.b16 %v968, %v964
    %v1317 = vpack.c.b16 %v973, %v969
    %v1318 = vpack.c.b16 %v974, %v970
    %v1319 = vpack.c.b16 %v975, %v971
    %v1320 = vpack.c.b16 %v976, %v972
    %v1321 = vpack.c.b16 %v981, %v977
    %v1322 = vpack.c.b16 %v982, %v978
    %v1323 = vpack.c.b16 %v983, %v979
    %v1324 = vpack.c.b16 %v984, %v980
    %v1325 = vpack.c.b16 %v989, %v985
    %v1326 = vpack.c.b16 %v990, %v986
    %v1327 = vpack.c.b16 %v991, %v987
    %v1328 = vpack.c.b16 %v992, %v988
    %v1329 = vpack.c.b16 %v997, %v993
    %v1330 = vpack.c.b16 %v998, %v994
    %v1331 = vpack.c.b16 %v999, %v995
    %v1332 = vpack.c.b16 %v1000, %v996
    %v1333 = vpack.c.b16 %v1005, %v1001
    %v1334 = vpack.c.b16 %v1006, %v1002
    %v1335 = vpack.c.b16 %v1007, %v1003
    %v1336 = vpack.c.b16 %v1008, %v1004
    %v1337 = vpack.c.b16 %v1013, %v1009
    %v1338 = vpack.c.b16 %v1014, %v1010
    %v1339 = vpack.c.b16 %v1015, %v1011
    %v1340 = vpack.c.b16 %v1016, %v1012
    %v1341 = vpack.c.b16 %v1021, %v1017
    %v1342 = vpack.c.b16 %v1022, %v1018
    %v1343 = vpack.c.b16 %v1023, %v1019
    %v1344 = vpack.c.b16 %v1024, %v1020
    %v1345 = vpack.c.b16 %v1029, %v1025
    %v1346 = vpack.c.b16 %v1030, %v1026
    %v1347 = vpack.c.b16 %v1031, %v1027
    %v1348 = vpack.c.b16 %v1032, %v1028
    %v1349 = vpack.c.b16 %v1037, %v1033
    %v1350 = vpack.c.b16 %v1038, %v1034
    %v1351 = vpack.c.b16 %v1039, %v1035
    %v1352 = vpack.c.b16 %v1040, %v1036
    %v1353 = vpack.c.b16 %v1045, %v1041
    %v1354 = vpack.c.b16 %v1046, %v1042
    %v1355 = vpack.c.b16 %v1047, %v1043
    %v1356 = vpack.c.b16 %v1048, %v1044
    %v1357 = vpack.c.b16 %v1053, %v1049
    %v1358 = vpack.c.b16 %v1054, %v1050
    %v1359 = vpack.c.b16 %v1055, %v1051
    %v1360 = vpack.c.b16 %v1056, %v1052
    %v1361 = vpack.c.b16 %v1061, %v1057
    %v1362 = vpack.c.b16 %v1062, %v1058
    %v1363 = vpack.c.b16 %v1063, %v1059
    %v1364 = vpack.c.b16 %v1064, %v1060
    %v1365 = vpack.c.b16 %v1069, %v1065
    %v1366 = vpack.c.b16 %v1070, %v1066
    %v1367 = vpack.c.b16 %v1071, %v1067
    %v1368 = vpack.c.b16 %v1072, %v1068
    %v1369 = vpack.c.b16 %v1077, %v1073
    %v1370 = vpack.c.b16 %v1078, %v1074
    %v1371 = vpack.c.b16 %v1079, %v1075
    %v1372 = vpack.c.b16 %v1080, %v1076
    %v1373 = vpack.c.b16 %v1085, %v1081
    %v1374 = vpack.c.b16 %v1086, %v1082
    %v1375 = vpack.c.b16 %v1087, %v1083
    %v1376 = vpack.c.b16 %v1088, %v1084
    %v1377 = vpack.c.b16 %v1093, %v1089
    %v1378 = vpack.c.b16 %v1094, %v1090
    %v1379 = vpack.c.b16 %v1095, %v1091
    %v1380 = vpack.c.b16 %v1096, %v1092
    %v1381 = vpack.c.b16 %v1101, %v1097
    %v1382 = vpack.c.b16 %v1102, %v1098
    %v1383 = vpack.c.b16 %v1103, %v1099
    %v1384 = vpack.c.b16 %v1104, %v1100
    %v1385 = vpack.c.b16 %v1109, %v1105
    %v1386 = vpack.c.b16 %v1110, %v1106
    %v1387 = vpack.c.b16 %v1111, %v1107
    %v1388 = vpack.c.b16 %v1112, %v1108
    %v1389 = vpack.c.b16 %v1117, %v1113
    %v1390 = vpack.c.b16 %v1118, %v1114
    %v1391 = vpack.c.b16 %v1119, %v1115
    %v1392 = vpack.c.b16 %v1120, %v1116
    %v1393 = vpack.c.b16 %v1125, %v1121
    %v1394 = vpack.c.b16 %v1126, %v1122
    %v1395 = vpack.c.b16 %v1127, %v1123
    %v1396 = vpack.c.b16 %v1128, %v1124
    %v1397 = vpack.c.b16 %v1133, %v1129
    %v1398 = vpack.c.b16 %v1134, %v1130
    %v1399 = vpack.c.b16 %v1135, %v1131
    %v1400 = vpack.c.b16 %v1136, %v1132
    %v1401 = vpack.c.b16 %v1141, %v1137
    %v1402 = vpack.c.b16 %v1142, %v1138
    %v1403 = vpack.c.b16 %v1143, %v1139
    %v1404 = vpack.c.b16 %v1144, %v1140
    %v1405 = vpack.c.b16 %v1149, %v1145
    %v1406 = vpack.c.b16 %v1150, %v1146
    %v1407 = vpack.c.b16 %v1151, %v1147
    %v1408 = vpack.c.b16 %v1152, %v1148
    %1665 = vmatprep.subr.bf16.mxu0 %v1154
    %1666 = vmatpush1.bf16.msra.mxu0 %v1153
    %1667 = vmatprep.subr.bf16.mxu0 %v1158
    %1668 = vmatpush1.bf16.msra.mxu0 %v1157
    %1669 = vmatprep.subr.bf16.mxu0 %v1162
    %1670 = vmatpush1.bf16.msra.mxu0 %v1161
    %1671 = vmatprep.subr.bf16.mxu0 %v1166
    %1672 = vmatpush1.bf16.msra.mxu0 %v1165
    %1673 = vmatprep.subr.bf16.mxu0 %v1170
    %1674 = vmatpush1.bf16.msra.mxu0 %v1169
    %1675 = vmatprep.subr.bf16.mxu0 %v1174
    %1676 = vmatpush1.bf16.msra.mxu0 %v1173
    %1677 = vmatprep.subr.bf16.mxu0 %v1178
    %1678 = vmatpush1.bf16.msra.mxu0 %v1177
    %1679 = vmatprep.subr.bf16.mxu0 %v1182
    %1680 = vmatpush1.bf16.msra.mxu0 %v1181
    %1681 = vmatprep.subr.bf16.mxu0 %v1186
    %1682 = vmatpush1.bf16.msra.mxu0 %v1185
    %1683 = vmatprep.subr.bf16.mxu0 %v1190
    %1684 = vmatpush1.bf16.msra.mxu0 %v1189
    %1685 = vmatprep.subr.bf16.mxu0 %v1194
    %1686 = vmatpush1.bf16.msra.mxu0 %v1193
    %1687 = vmatprep.subr.bf16.mxu0 %v1198
    %1688 = vmatpush1.bf16.msra.mxu0 %v1197
    %1689 = vmatprep.subr.bf16.mxu0 %v1202
    %1690 = vmatpush1.bf16.msra.mxu0 %v1201
    %1691 = vmatprep.subr.bf16.mxu0 %v1206
    %1692 = vmatpush1.bf16.msra.mxu0 %v1205
    %1693 = vmatprep.subr.bf16.mxu0 %v1210
    %1694 = vmatpush1.bf16.msra.mxu0 %v1209
    %1695 = vmatprep.subr.bf16.mxu0 %v1214
    %1696 = vmatpush1.bf16.msra.mxu0 %v1213
    %1697 = vmatprep.mubr.bf16.mxu0 %v365
    %1698 = vmatmul.mubr.bf16.gmra.mrb[0].mxu0 %v351
    %v1699 = vpop.f32.mrb[0].mxu0
    %v1700 = vadd.f32 %v310, %v1699
    %v1701 = vpop.f32.mrb[0].mxu0
    %v1702 = vadd.f32 %v314, %v1701
    %v1703 = vpop.f32.mrb[0].mxu0
    %v1704 = vpop.f32.mrb[0].mxu0
    %1705 = vdwg.mxu0
    %1706 = vmatprep.subr.bf16.mxu0 %v1218
    %1707 = vmatpush1.bf16.msra.mxu0 %v1217
    %1708 = vmatprep.subr.bf16.mxu0 %v1222
    %1709 = vmatpush1.bf16.msra.mxu0 %v1221
    %1710 = vmatprep.subr.bf16.mxu0 %v1226
    %1711 = vmatpush1.bf16.msra.mxu0 %v1225
    %1712 = vmatprep.subr.bf16.mxu0 %v1230
    %1713 = vmatpush1.bf16.msra.mxu0 %v1229
    %1714 = vmatprep.subr.bf16.mxu0 %v1234
    %1715 = vmatpush1.bf16.msra.mxu0 %v1233
    %1716 = vmatprep.subr.bf16.mxu0 %v1238
    %1717 = vmatpush1.bf16.msra.mxu0 %v1237
    %1718 = vmatprep.subr.bf16.mxu0 %v1242
    %1719 = vmatpush1.bf16.msra.mxu0 %v1241
    %1720 = vmatprep.subr.bf16.mxu0 %v1246
    %1721 = vmatpush1.bf16.msra.mxu0 %v1245
    %1722 = vmatprep.subr.bf16.mxu0 %v1250
    %1723 = vmatpush1.bf16.msra.mxu0 %v1249
    %1724 = vmatprep.subr.bf16.mxu0 %v1254
    %1725 = vmatpush1.bf16.msra.mxu0 %v1253
    %1726 = vmatprep.subr.bf16.mxu0 %v1258
    %1727 = vmatpush1.bf16.msra.mxu0 %v1257
    %1728 = vmatprep.subr.bf16.mxu0 %v1262
    %1729 = vmatpush1.bf16.msra.mxu0 %v1261
    %1730 = vmatprep.subr.bf16.mxu0 %v1266
    %1731 = vmatpush1.bf16.msra.mxu0 %v1265
    %1732 = vmatprep.subr.bf16.mxu0 %v1270
    %1733 = vmatpush1.bf16.msra.mxu0 %v1269
    %1734 = vmatprep.subr.bf16.mxu0 %v1274
    %1735 = vmatpush1.bf16.msra.mxu0 %v1273
    %1736 = vmatprep.subr.bf16.mxu0 %v1278
    %1737 = vmatpush1.bf16.msra.mxu0 %v1277
    %1738 = vmatprep.mubr.bf16.mxu0 %v375
    %1739 = vmatmul.mubr.bf16.gmra.mrb[0].mxu0 %v373
    %v1740 = vpop.f32.mrb[0].mxu0
    %v1741 = vadd.f32 %v1700, %v1740
    %v1742 = vpop.f32.mrb[0].mxu0
    %v1743 = vadd.f32 %v1702, %v1742
    %v1744 = vpop.f32.mrb[0].mxu0
    %v1745 = vpop.f32.mrb[0].mxu0
    %1746 = vdwg.mxu0
    %1747 = vmatprep.subr.bf16.mxu0 %v1282
    %1748 = vmatpush1.bf16.msra.mxu0 %v1281
    %1749 = vmatprep.subr.bf16.mxu0 %v1286
    %1750 = vmatpush1.bf16.msra.mxu0 %v1285
    %1751 = vmatprep.subr.bf16.mxu0 %v1290
    %1752 = vmatpush1.bf16.msra.mxu0 %v1289
    %1753 = vmatprep.subr.bf16.mxu0 %v1294
    %1754 = vmatpush1.bf16.msra.mxu0 %v1293
    %1755 = vmatprep.subr.bf16.mxu0 %v1298
    %1756 = vmatpush1.bf16.msra.mxu0 %v1297
    %1757 = vmatprep.subr.bf16.mxu0 %v1302
    %1758 = vmatpush1.bf16.msra.mxu0 %v1301
    %1759 = vmatprep.subr.bf16.mxu0 %v1306
    %1760 = vmatpush1.bf16.msra.mxu0 %v1305
    %1761 = vmatprep.subr.bf16.mxu0 %v1310
    %1762 = vmatpush1.bf16.msra.mxu0 %v1309
    %1763 = vmatprep.subr.bf16.mxu0 %v1314
    %1764 = vmatpush1.bf16.msra.mxu0 %v1313
    %1765 = vmatprep.subr.bf16.mxu0 %v1318
    %1766 = vmatpush1.bf16.msra.mxu0 %v1317
    %1767 = vmatprep.subr.bf16.mxu0 %v1322
    %1768 = vmatpush1.bf16.msra.mxu0 %v1321
    %1769 = vmatprep.subr.bf16.mxu0 %v1326
    %1770 = vmatpush1.bf16.msra.mxu0 %v1325
    %1771 = vmatprep.subr.bf16.mxu0 %v1330
    %1772 = vmatpush1.bf16.msra.mxu0 %v1329
    %1773 = vmatprep.subr.bf16.mxu0 %v1334
    %1774 = vmatpush1.bf16.msra.mxu0 %v1333
    %1775 = vmatprep.subr.bf16.mxu0 %v1338
    %1776 = vmatpush1.bf16.msra.mxu0 %v1337
    %1777 = vmatprep.subr.bf16.mxu0 %v1342
    %1778 = vmatpush1.bf16.msra.mxu0 %v1341
    %1779 = vmatprep.mubr.bf16.mxu0 %v372
    %1780 = vmatmul.mubr.bf16.gmra.mrb[0].mxu0 %v358
    %v1781 = vpop.f32.mrb[0].mxu0
    %v1782 = vadd.f32 %v1741, %v1781
    %v1783 = vpop.f32.mrb[0].mxu0
    %v1784 = vadd.f32 %v1743, %v1783
    %v1785 = vpop.f32.mrb[0].mxu0
    %v1786 = vpop.f32.mrb[0].mxu0
    %1787 = vdwg.mxu0
    %1788 = vmatprep.subr.bf16.mxu0 %v1346
    %1789 = vmatpush1.bf16.msra.mxu0 %v1345
    %1790 = vmatprep.subr.bf16.mxu0 %v1350
    %1791 = vmatpush1.bf16.msra.mxu0 %v1349
    %1792 = vmatprep.subr.bf16.mxu0 %v1354
    %1793 = vmatpush1.bf16.msra.mxu0 %v1353
    %1794 = vmatprep.subr.bf16.mxu0 %v1358
    %1795 = vmatpush1.bf16.msra.mxu0 %v1357
    %1796 = vmatprep.subr.bf16.mxu0 %v1362
    %1797 = vmatpush1.bf16.msra.mxu0 %v1361
    %1798 = vmatprep.subr.bf16.mxu0 %v1366
    %1799 = vmatpush1.bf16.msra.mxu0 %v1365
    %1800 = vmatprep.subr.bf16.mxu0 %v1370
    %1801 = vmatpush1.bf16.msra.mxu0 %v1369
    %1802 = vmatprep.subr.bf16.mxu0 %v1374
    %1803 = vmatpush1.bf16.msra.mxu0 %v1373
    %1804 = vmatprep.subr.bf16.mxu0 %v1378
    %1805 = vmatpush1.bf16.msra.mxu0 %v1377
    %1806 = vmatprep.subr.bf16.mxu0 %v1382
    %1807 = vmatpush1.bf16.msra.mxu0 %v1381
    %1808 = vmatprep.subr.bf16.mxu0 %v1386
    %1809 = vmatpush1.bf16.msra.mxu0 %v1385
    %1810 = vmatprep.subr.bf16.mxu0 %v1390
    %1811 = vmatpush1.bf16.msra.mxu0 %v1389
    %1812 = vmatprep.subr.bf16.mxu0 %v1394
    %1813 = vmatpush1.bf16.msra.mxu0 %v1393
    %1814 = vmatprep.subr.bf16.mxu0 %v1398
    %1815 = vmatpush1.bf16.msra.mxu0 %v1397
    %1816 = vmatprep.subr.bf16.mxu0 %v1402
    %1817 = vmatpush1.bf16.msra.mxu0 %v1401
    %1818 = vmatprep.subr.bf16.mxu0 %v1406
    %1819 = vmatpush1.bf16.msra.mxu0 %v1405
    %1820 = vmatprep.mubr.bf16.mxu0 %v376
    %1821 = vmatmul.mubr.bf16.gmra.mrb[0].mxu0 %v374
    %v1822 = vpop.f32.mrb[0].mxu0
    %v1823 = vadd.f32 %v1782, %v1822
    %v1824 = vpop.f32.mrb[0].mxu0
    %v1825 = vadd.f32 %v1784, %v1824
    %v1826 = vpop.f32.mrb[0].mxu0
    %v1827 = vpop.f32.mrb[0].mxu0
    %1828 = vdwg.mxu0
    %1829 = vmatprep.subr.bf16.mxu0 %v1156
    %1830 = vmatpush1.bf16.msra.mxu0 %v1155
    %1831 = vmatprep.subr.bf16.mxu0 %v1160
    %1832 = vmatpush1.bf16.msra.mxu0 %v1159
    %1833 = vmatprep.subr.bf16.mxu0 %v1164
    %1834 = vmatpush1.bf16.msra.mxu0 %v1163
    %1835 = vmatprep.subr.bf16.mxu0 %v1168
    %1836 = vmatpush1.bf16.msra.mxu0 %v1167
    %1837 = vmatprep.subr.bf16.mxu0 %v1172
    %1838 = vmatpush1.bf16.msra.mxu0 %v1171
    %1839 = vmatprep.subr.bf16.mxu0 %v1176
    %1840 = vmatpush1.bf16.msra.mxu0 %v1175
    %1841 = vmatprep.subr.bf16.mxu0 %v1180
    %1842 = vmatpush1.bf16.msra.mxu0 %v1179
    %1843 = vmatprep.subr.bf16.mxu0 %v1184
    %1844 = vmatpush1.bf16.msra.mxu0 %v1183
    %1845 = vmatprep.subr.bf16.mxu0 %v1188
    %1846 = vmatpush1.bf16.msra.mxu0 %v1187
    %1847 = vmatprep.subr.bf16.mxu0 %v1192
    %1848 = vmatpush1.bf16.msra.mxu0 %v1191
    %1849 = vmatprep.subr.bf16.mxu0 %v1196
    %1850 = vmatpush1.bf16.msra.mxu0 %v1195
    %1851 = vmatprep.subr.bf16.mxu0 %v1200
    %1852 = vmatpush1.bf16.msra.mxu0 %v1199
    %1853 = vmatprep.subr.bf16.mxu0 %v1204
    %1854 = vmatpush1.bf16.msra.mxu0 %v1203
    %1855 = vmatprep.subr.bf16.mxu0 %v1208
    %1856 = vmatpush1.bf16.msra.mxu0 %v1207
    %1857 = vmatprep.subr.bf16.mxu0 %v1212
    %1858 = vmatpush1.bf16.msra.mxu0 %v1211
    %1859 = vmatprep.subr.bf16.mxu0 %v1216
    %1860 = vmatpush1.bf16.msra.mxu0 %v1215
    %1861 = vmatprep.mubr.bf16.mxu0 %v365
    %1862 = vmatmul.mubr.bf16.gmra.mrb[0].mxu0 %v351
    %v1863 = vpop.f32.mrb[0].mxu0
    %v1864 = vadd.f32 %v318, %v1863
    %v1865 = vpop.f32.mrb[0].mxu0
    %v1866 = vadd.f32 %v322, %v1865
    %v1867 = vpop.f32.mrb[0].mxu0
    %v1868 = vpop.f32.mrb[0].mxu0
    %1869 = vdwg.mxu0
    %1870 = vmatprep.subr.bf16.mxu0 %v1220
    %1871 = vmatpush1.bf16.msra.mxu0 %v1219
    %1872 = vmatprep.subr.bf16.mxu0 %v1224
    %1873 = vmatpush1.bf16.msra.mxu0 %v1223
    %1874 = vmatprep.subr.bf16.mxu0 %v1228
    %1875 = vmatpush1.bf16.msra.mxu0 %v1227
    %1876 = vmatprep.subr.bf16.mxu0 %v1232
    %1877 = vmatpush1.bf16.msra.mxu0 %v1231
    %1878 = vmatprep.subr.bf16.mxu0 %v1236
    %1879 = vmatpush1.bf16.msra.mxu0 %v1235
    %1880 = vmatprep.subr.bf16.mxu0 %v1240
    %1881 = vmatpush1.bf16.msra.mxu0 %v1239
    %1882 = vmatprep.subr.bf16.mxu0 %v1244
    %1883 = vmatpush1.bf16.msra.mxu0 %v1243
    %1884 = vmatprep.subr.bf16.mxu0 %v1248
    %1885 = vmatpush1.bf16.msra.mxu0 %v1247
    %1886 = vmatprep.subr.bf16.mxu0 %v1252
    %1887 = vmatpush1.bf16.msra.mxu0 %v1251
    %1888 = vmatprep.subr.bf16.mxu0 %v1256
    %1889 = vmatpush1.bf16.msra.mxu0 %v1255
    %1890 = vmatprep.subr.bf16.mxu0 %v1260
    %1891 = vmatpush1.bf16.msra.mxu0 %v1259
    %1892 = vmatprep.subr.bf16.mxu0 %v1264
    %1893 = vmatpush1.bf16.msra.mxu0 %v1263
    %1894 = vmatprep.subr.bf16.mxu0 %v1268
    %1895 = vmatpush1.bf16.msra.mxu0 %v1267
    %1896 = vmatprep.subr.bf16.mxu0 %v1272
    %1897 = vmatpush1.bf16.msra.mxu0 %v1271
    %1898 = vmatprep.subr.bf16.mxu0 %v1276
    %1899 = vmatpush1.bf16.msra.mxu0 %v1275
    %1900 = vmatprep.subr.bf16.mxu0 %v1280
    %1901 = vmatpush1.bf16.msra.mxu0 %v1279
    %1902 = vmatprep.mubr.bf16.mxu0 %v375
    %1903 = vmatmul.mubr.bf16.gmra.mrb[0].mxu0 %v373
    %v1904 = vpop.f32.mrb[0].mxu0
    %v1905 = vadd.f32 %v1864, %v1904
    %v1906 = vpop.f32.mrb[0].mxu0
    %v1907 = vadd.f32 %v1866, %v1906
    %v1908 = vpop.f32.mrb[0].mxu0
    %v1909 = vpop.f32.mrb[0].mxu0
    %1910 = vdwg.mxu0
    %1911 = vmatprep.subr.bf16.mxu0 %v1284
    %1912 = vmatpush1.bf16.msra.mxu0 %v1283
    %1913 = vmatprep.subr.bf16.mxu0 %v1288
    %1914 = vmatpush1.bf16.msra.mxu0 %v1287
    %1915 = vmatprep.subr.bf16.mxu0 %v1292
    %1916 = vmatpush1.bf16.msra.mxu0 %v1291
    %1917 = vmatprep.subr.bf16.mxu0 %v1296
    %1918 = vmatpush1.bf16.msra.mxu0 %v1295
    %1919 = vmatprep.subr.bf16.mxu0 %v1300
    %1920 = vmatpush1.bf16.msra.mxu0 %v1299
    %1921 = vmatprep.subr.bf16.mxu0 %v1304
    %1922 = vmatpush1.bf16.msra.mxu0 %v1303
    %1923 = vmatprep.subr.bf16.mxu0 %v1308
    %1924 = vmatpush1.bf16.msra.mxu0 %v1307
    %1925 = vmatprep.subr.bf16.mxu0 %v1312
    %1926 = vmatpush1.bf16.msra.mxu0 %v1311
    %1927 = vmatprep.subr.bf16.mxu0 %v1316
    %1928 = vmatpush1.bf16.msra.mxu0 %v1315
    %1929 = vmatprep.subr.bf16.mxu0 %v1320
    %1930 = vmatpush1.bf16.msra.mxu0 %v1319
    %1931 = vmatprep.subr.bf16.mxu0 %v1324
    %1932 = vmatpush1.bf16.msra.mxu0 %v1323
    %1933 = vmatprep.subr.bf16.mxu0 %v1328
    %1934 = vmatpush1.bf16.msra.mxu0 %v1327
    %1935 = vmatprep.subr.bf16.mxu0 %v1332
    %1936 = vmatpush1.bf16.msra.mxu0 %v1331
    %1937 = vmatprep.subr.bf16.mxu0 %v1336
    %1938 = vmatpush1.bf16.msra.mxu0 %v1335
    %1939 = vmatprep.subr.bf16.mxu0 %v1340
    %1940 = vmatpush1.bf16.msra.mxu0 %v1339
    %1941 = vmatprep.subr.bf16.mxu0 %v1344
    %1942 = vmatpush1.bf16.msra.mxu0 %v1343
    %1943 = vmatprep.mubr.bf16.mxu0 %v372
    %1944 = vmatmul.mubr.bf16.gmra.mrb[0].mxu0 %v358
    %v1945 = vpop.f32.mrb[0].mxu0
    %v1946 = vadd.f32 %v1905, %v1945
    %v1947 = vpop.f32.mrb[0].mxu0
    %v1948 = vadd.f32 %v1907, %v1947
    %v1949 = vpop.f32.mrb[0].mxu0
    %v1950 = vpop.f32.mrb[0].mxu0
    %1951 = vdwg.mxu0
    %1952 = vmatprep.subr.bf16.mxu0 %v1348
    %1953 = vmatpush1.bf16.msra.mxu0 %v1347
    %1954 = vmatprep.subr.bf16.mxu0 %v1352
    %1955 = vmatpush1.bf16.msra.mxu0 %v1351
    %1956 = vmatprep.subr.bf16.mxu0 %v1356
    %1957 = vmatpush1.bf16.msra.mxu0 %v1355
    %1958 = vmatprep.subr.bf16.mxu0 %v1360
    %1959 = vmatpush1.bf16.msra.mxu0 %v1359
    %1960 = vmatprep.subr.bf16.mxu0 %v1364
    %1961 = vmatpush1.bf16.msra.mxu0 %v1363
    %1962 = vmatprep.subr.bf16.mxu0 %v1368
    %1963 = vmatpush1.bf16.msra.mxu0 %v1367
    %1964 = vmatprep.subr.bf16.mxu0 %v1372
    %1965 = vmatpush1.bf16.msra.mxu0 %v1371
    %1966 = vmatprep.subr.bf16.mxu0 %v1376
    %1967 = vmatpush1.bf16.msra.mxu0 %v1375
    %1968 = vmatprep.subr.bf16.mxu0 %v1380
    %1969 = vmatpush1.bf16.msra.mxu0 %v1379
    %1970 = vmatprep.subr.bf16.mxu0 %v1384
    %1971 = vmatpush1.bf16.msra.mxu0 %v1383
    %1972 = vmatprep.subr.bf16.mxu0 %v1388
    %1973 = vmatpush1.bf16.msra.mxu0 %v1387
    %1974 = vmatprep.subr.bf16.mxu0 %v1392
    %1975 = vmatpush1.bf16.msra.mxu0 %v1391
    %1976 = vmatprep.subr.bf16.mxu0 %v1396
    %1977 = vmatpush1.bf16.msra.mxu0 %v1395
    %1978 = vmatprep.subr.bf16.mxu0 %v1400
    %1979 = vmatpush1.bf16.msra.mxu0 %v1399
    %1980 = vmatprep.subr.bf16.mxu0 %v1404
    %1981 = vmatpush1.bf16.msra.mxu0 %v1403
    %1982 = vmatprep.subr.bf16.mxu0 %v1408
    %1983 = vmatpush1.bf16.msra.mxu0 %v1407
    %1984 = vmatprep.mubr.bf16.mxu0 %v376
    %1985 = vmatmul.mubr.bf16.gmra.mrb[0].mxu0 %v374
    %v1986 = vpop.f32.mrb[0].mxu0
    %v1987 = vadd.f32 %v1946, %v1986
    %v1988 = vpop.f32.mrb[0].mxu0
    %v1989 = vadd.f32 %v1948, %v1988
    %v1990 = vpop.f32.mrb[0].mxu0
    %v1991 = vpop.f32.mrb[0].mxu0
    %1992 = vdwg.mxu0
    %v1993 = vmax.f32 %v1823, 0.0
    %v1994 = vmax.f32 %v1825, 0.0
    %v1995 = vmax.f32 %v1987, 0.0
    %v1996 = vmax.f32 %v1989, 0.0
    %v1997 = vpack.c.bf16 %v1993, %v1993
    %v1998 = vpack.c.bf16 %v1994, %v1994
    %v1999 = vpack.c.bf16 %v1995, %v1995
    %v2000 = vpack.c.bf16 %v1996, %v1996
    %v2001 = vld [vmem:[%s3] sm:$0xf]
    %v2002 = vld [vmem:[%s3 + $0x4] sm:$0xf]
    %v2003 = vld [vmem:[%s3 + $0x8] sm:$0xf]
    %v2004 = vld [vmem:[%s3 + $0xc] sm:$0xf]
    %v2005 = vld [vmem:[%s3 + $0x10] sm:$0xf]
    %v2006 = vld [vmem:[%s3 + $0x14] sm:$0xf]
    %v2007 = vld [vmem:[%s3 + $0x18] sm:$0xf]
    %v2008 = vld [vmem:[%s3 + $0x1c] sm:$0xf]
    %v2009 = vld [vmem:[%s3 + $0x20] sm:$0xf]
    %v2010 = vld [vmem:[%s3 + $0x24] sm:$0xf]
    %v2011 = vld [vmem:[%s3 + $0x28] sm:$0xf]
    %v2012 = vld [vmem:[%s3 + $0x2c] sm:$0xf]
    %v2013 = vld [vmem:[%s3 + $0x30] sm:$0xf]
    %v2014 = vld [vmem:[%s3 + $0x34] sm:$0xf]
    %v2015 = vld [vmem:[%s3 + $0x38] sm:$0xf]
    %v2016 = vld [vmem:[%s3 + $0x3c] sm:$0xf]
    %v2017 = vld [vmem:[%s3 + $0x40] sm:$0xf]
    %v2018 = vld [vmem:[%s3 + $0x44] sm:$0xf]
    %v2019 = vld [vmem:[%s3 + $0x48] sm:$0xf]
    %v2020 = vld [vmem:[%s3 + $0x4c] sm:$0xf]
    %v2021 = vld [vmem:[%s3 + $0x50] sm:$0xf]
    %v2022 = vld [vmem:[%s3 + $0x54] sm:$0xf]
    %v2023 = vld [vmem:[%s3 + $0x58] sm:$0xf]
    %v2024 = vld [vmem:[%s3 + $0x5c] sm:$0xf]
    %v2025 = vld [vmem:[%s3 + $0x60] sm:$0xf]
    %v2026 = vld [vmem:[%s3 + $0x64] sm:$0xf]
    %v2027 = vld [vmem:[%s3 + $0x68] sm:$0xf]
    %v2028 = vld [vmem:[%s3 + $0x6c] sm:$0xf]
    %v2029 = vld [vmem:[%s3 + $0x70] sm:$0xf]
    %v2030 = vld [vmem:[%s3 + $0x74] sm:$0xf]
    %v2031 = vld [vmem:[%s3 + $0x78] sm:$0xf]
    %v2032 = vld [vmem:[%s3 + $0x7c] sm:$0xf]
    %v2033 = vld [vmem:[%s3 + $0x80] sm:$0xf]
    %v2034 = vld [vmem:[%s3 + $0x84] sm:$0xf]
    %v2035 = vld [vmem:[%s3 + $0x88] sm:$0xf]
    %v2036 = vld [vmem:[%s3 + $0x8c] sm:$0xf]
    %v2037 = vld [vmem:[%s3 + $0x90] sm:$0xf]
    %v2038 = vld [vmem:[%s3 + $0x94] sm:$0xf]
    %v2039 = vld [vmem:[%s3 + $0x98] sm:$0xf]
    %v2040 = vld [vmem:[%s3 + $0x9c] sm:$0xf]
    %v2041 = vld [vmem:[%s3 + $0xa0] sm:$0xf]
    %v2042 = vld [vmem:[%s3 + $0xa4] sm:$0xf]
    %v2043 = vld [vmem:[%s3 + $0xa8] sm:$0xf]
    %v2044 = vld [vmem:[%s3 + $0xac] sm:$0xf]
    %v2045 = vld [vmem:[%s3 + $0xb0] sm:$0xf]
    %v2046 = vld [vmem:[%s3 + $0xb4] sm:$0xf]
    %v2047 = vld [vmem:[%s3 + $0xb8] sm:$0xf]
    %v2048 = vld [vmem:[%s3 + $0xbc] sm:$0xf]
    %v2049 = vld [vmem:[%s3 + $0xc0] sm:$0xf]
    %v2050 = vld [vmem:[%s3 + $0xc4] sm:$0xf]
    %v2051 = vld [vmem:[%s3 + $0xc8] sm:$0xf]
    %v2052 = vld [vmem:[%s3 + $0xcc] sm:$0xf]
    %v2053 = vld [vmem:[%s3 + $0xd0] sm:$0xf]
    %v2054 = vld [vmem:[%s3 + $0xd4] sm:$0xf]
    %v2055 = vld [vmem:[%s3 + $0xd8] sm:$0xf]
    %v2056 = vld [vmem:[%s3 + $0xdc] sm:$0xf]
    %v2057 = vld [vmem:[%s3 + $0xe0] sm:$0xf]
    %v2058 = vld [vmem:[%s3 + $0xe4] sm:$0xf]
    %v2059 = vld [vmem:[%s3 + $0xe8] sm:$0xf]
    %v2060 = vld [vmem:[%s3 + $0xec] sm:$0xf]
    %v2061 = vld [vmem:[%s3 + $0xf0] sm:$0xf]
    %v2062 = vld [vmem:[%s3 + $0xf4] sm:$0xf]
    %v2063 = vld [vmem:[%s3 + $0xf8] sm:$0xf]
    %v2064 = vld [vmem:[%s3 + $0xfc] sm:$0xf]
    %v2065 = vld [vmem:[%s4] sm:$0x1]
    %v2067 = vlaneseq
    %v2068 = vshrl.u32 %v2067, 7
    %v2069 = vsub.s32 0, %v2068
    %v2070 = vrot.slane %v2065, %v2069
    %v2136 = vunpack.c.l.b16 %v2001
    %v2137 = vunpack.c.l.b16 %v2002
    %v2138 = vunpack.c.l.b16 %v2003
    %v2139 = vunpack.c.l.b16 %v2004
    %v2140 = vunpack.c.l.b16 %v2005
    %v2141 = vunpack.c.l.b16 %v2006
    %v2142 = vunpack.c.l.b16 %v2007
    %v2143 = vunpack.c.l.b16 %v2008
    %v2144 = vunpack.c.l.b16 %v2009
    %v2145 = vunpack.c.l.b16 %v2010
    %v2146 = vunpack.c.l.b16 %v2011
    %v2147 = vunpack.c.l.b16 %v2012
    %v2148 = vunpack.c.l.b16 %v2013
    %v2149 = vunpack.c.l.b16 %v2014
    %v2150 = vunpack.c.l.b16 %v2015
    %v2151 = vunpack.c.l.b16 %v2016
    %v2152 = vunpack.c.l.b16 %v2017
    %v2153 = vunpack.c.l.b16 %v2018
    %v2154 = vunpack.c.l.b16 %v2019
    %v2155 = vunpack.c.l.b16 %v2020
    %v2156 = vunpack.c.l.b16 %v2021
    %v2157 = vunpack.c.l.b16 %v2022
    %v2158 = vunpack.c.l.b16 %v2023
    %v2159 = vunpack.c.l.b16 %v2024
    %v2160 = vunpack.c.l.b16 %v2025
    %v2161 = vunpack.c.l.b16 %v2026
    %v2162 = vunpack.c.l.b16 %v2027
    %v2163 = vunpack.c.l.b16 %v2028
    %v2164 = vunpack.c.l.b16 %v2029
    %v2165 = vunpack.c.l.b16 %v2030
    %v2166 = vunpack.c.l.b16 %v2031
    %v2167 = vunpack.c.l.b16 %v2032
    %v2168 = vunpack.c.l.b16 %v2033
    %v2169 = vunpack.c.l.b16 %v2034
    %v2170 = vunpack.c.l.b16 %v2035
    %v2171 = vunpack.c.l.b16 %v2036
    %v2172 = vunpack.c.l.b16 %v2037
    %v2173 = vunpack.c.l.b16 %v2038
    %v2174 = vunpack.c.l.b16 %v2039
    %v2175 = vunpack.c.l.b16 %v2040
    %v2176 = vunpack.c.l.b16 %v2041
    %v2177 = vunpack.c.l.b16 %v2042
    %v2178 = vunpack.c.l.b16 %v2043
    %v2179 = vunpack.c.l.b16 %v2044
    %v2180 = vunpack.c.l.b16 %v2045
    %v2181 = vunpack.c.l.b16 %v2046
    %v2182 = vunpack.c.l.b16 %v2047
    %v2183 = vunpack.c.l.b16 %v2048
    %v2184 = vunpack.c.l.b16 %v2049
    %v2185 = vunpack.c.l.b16 %v2050
    %v2186 = vunpack.c.l.b16 %v2051
    %v2187 = vunpack.c.l.b16 %v2052
    %v2188 = vunpack.c.l.b16 %v2053
    %v2189 = vunpack.c.l.b16 %v2054
    %v2190 = vunpack.c.l.b16 %v2055
    %v2191 = vunpack.c.l.b16 %v2056
    %v2192 = vunpack.c.l.b16 %v2057
    %v2193 = vunpack.c.l.b16 %v2058
    %v2194 = vunpack.c.l.b16 %v2059
    %v2195 = vunpack.c.l.b16 %v2060
    %v2196 = vunpack.c.l.b16 %v2061
    %v2197 = vunpack.c.l.b16 %v2062
    %v2198 = vunpack.c.l.b16 %v2063
    %v2199 = vunpack.c.l.b16 %v2064
    %v2200 = vpack.c.b16 %v2137, %v2136
    %v2201 = vpack.c.b16 %v2139, %v2138
    %v2202 = vpack.c.b16 %v2141, %v2140
    %v2203 = vpack.c.b16 %v2143, %v2142
    %v2204 = vpack.c.b16 %v2145, %v2144
    %v2205 = vpack.c.b16 %v2147, %v2146
    %v2206 = vpack.c.b16 %v2149, %v2148
    %v2207 = vpack.c.b16 %v2151, %v2150
    %v2208 = vpack.c.b16 %v2153, %v2152
    %v2209 = vpack.c.b16 %v2155, %v2154
    %v2210 = vpack.c.b16 %v2157, %v2156
    %v2211 = vpack.c.b16 %v2159, %v2158
    %v2212 = vpack.c.b16 %v2161, %v2160
    %v2213 = vpack.c.b16 %v2163, %v2162
    %v2214 = vpack.c.b16 %v2165, %v2164
    %v2215 = vpack.c.b16 %v2167, %v2166
    %v2216 = vpack.c.b16 %v2169, %v2168
    %v2217 = vpack.c.b16 %v2171, %v2170
    %v2218 = vpack.c.b16 %v2173, %v2172
    %v2219 = vpack.c.b16 %v2175, %v2174
    %v2220 = vpack.c.b16 %v2177, %v2176
    %v2221 = vpack.c.b16 %v2179, %v2178
    %v2222 = vpack.c.b16 %v2181, %v2180
    %v2223 = vpack.c.b16 %v2183, %v2182
    %v2224 = vpack.c.b16 %v2185, %v2184
    %v2225 = vpack.c.b16 %v2187, %v2186
    %v2226 = vpack.c.b16 %v2189, %v2188
    %v2227 = vpack.c.b16 %v2191, %v2190
    %v2228 = vpack.c.b16 %v2193, %v2192
    %v2229 = vpack.c.b16 %v2195, %v2194
    %v2230 = vpack.c.b16 %v2197, %v2196
    %v2231 = vpack.c.b16 %v2199, %v2198
    %2264 = vmatprep.subr.bf16.mxu0 0
    %2265 = vmatpush1.bf16.msra.mxu0 %v2200
    %2266 = vmatprep.subr.bf16.mxu0 0
    %2267 = vmatpush1.bf16.msra.mxu0 %v2201
    %2268 = vmatprep.subr.bf16.mxu0 0
    %2269 = vmatpush1.bf16.msra.mxu0 %v2202
    %2270 = vmatprep.subr.bf16.mxu0 0
    %2271 = vmatpush1.bf16.msra.mxu0 %v2203
    %2272 = vmatprep.subr.bf16.mxu0 0
    %2273 = vmatpush1.bf16.msra.mxu0 %v2204
    %2274 = vmatprep.subr.bf16.mxu0 0
    %2275 = vmatpush1.bf16.msra.mxu0 %v2205
    %2276 = vmatprep.subr.bf16.mxu0 0
    %2277 = vmatpush1.bf16.msra.mxu0 %v2206
    %2278 = vmatprep.subr.bf16.mxu0 0
    %2279 = vmatpush1.bf16.msra.mxu0 %v2207
    %2280 = vmatprep.subr.bf16.mxu0 0
    %2281 = vmatpush1.bf16.msra.mxu0 %v2208
    %2282 = vmatprep.subr.bf16.mxu0 0
    %2283 = vmatpush1.bf16.msra.mxu0 %v2209
    %2284 = vmatprep.subr.bf16.mxu0 0
    %2285 = vmatpush1.bf16.msra.mxu0 %v2210
    %2286 = vmatprep.subr.bf16.mxu0 0
    %2287 = vmatpush1.bf16.msra.mxu0 %v2211
    %2288 = vmatprep.subr.bf16.mxu0 0
    %2289 = vmatpush1.bf16.msra.mxu0 %v2212
    %2290 = vmatprep.subr.bf16.mxu0 0
    %2291 = vmatpush1.bf16.msra.mxu0 %v2213
    %2292 = vmatprep.subr.bf16.mxu0 0
    %2293 = vmatpush1.bf16.msra.mxu0 %v2214
    %2294 = vmatprep.subr.bf16.mxu0 0
    %2295 = vmatpush1.bf16.msra.mxu0 %v2215
    %2296 = vmatprep.mubr.bf16.mxu0 %v1998
    %2297 = vmatmul.mubr.bf16.gmra.mrb[0].mxu0 %v1997
    %v2298 = vpop.f32.mrb[0].mxu0
    %v2299 = vadd.f32 %v2070, %v2298
    %v2300 = vpop.f32.mrb[0].mxu0
    %v2301 = vpop.f32.mrb[0].mxu0
    %v2302 = vpop.f32.mrb[0].mxu0
    %2303 = vdwg.mxu0
    %2304 = vmatprep.subr.bf16.mxu0 0
    %2305 = vmatpush1.bf16.msra.mxu0 %v2216
    %2306 = vmatprep.subr.bf16.mxu0 0
    %2307 = vmatpush1.bf16.msra.mxu0 %v2217
    %2308 = vmatprep.subr.bf16.mxu0 0
    %2309 = vmatpush1.bf16.msra.mxu0 %v2218
    %2310 = vmatprep.subr.bf16.mxu0 0
    %2311 = vmatpush1.bf16.msra.mxu0 %v2219
    %2312 = vmatprep.subr.bf16.mxu0 0
    %2313 = vmatpush1.bf16.msra.mxu0 %v2220
    %2314 = vmatprep.subr.bf16.mxu0 0
    %2315 = vmatpush1.bf16.msra.mxu0 %v2221
    %2316 = vmatprep.subr.bf16.mxu0 0
    %2317 = vmatpush1.bf16.msra.mxu0 %v2222
    %2318 = vmatprep.subr.bf16.mxu0 0
    %2319 = vmatpush1.bf16.msra.mxu0 %v2223
    %2320 = vmatprep.subr.bf16.mxu0 0
    %2321 = vmatpush1.bf16.msra.mxu0 %v2224
    %2322 = vmatprep.subr.bf16.mxu0 0
    %2323 = vmatpush1.bf16.msra.mxu0 %v2225
    %2324 = vmatprep.subr.bf16.mxu0 0
    %2325 = vmatpush1.bf16.msra.mxu0 %v2226
    %2326 = vmatprep.subr.bf16.mxu0 0
    %2327 = vmatpush1.bf16.msra.mxu0 %v2227
    %2328 = vmatprep.subr.bf16.mxu0 0
    %2329 = vmatpush1.bf16.msra.mxu0 %v2228
    %2330 = vmatprep.subr.bf16.mxu0 0
    %2331 = vmatpush1.bf16.msra.mxu0 %v2229
    %2332 = vmatprep.subr.bf16.mxu0 0
    %2333 = vmatpush1.bf16.msra.mxu0 %v2230
    %2334 = vmatprep.subr.bf16.mxu0 0
    %2335 = vmatpush1.bf16.msra.mxu0 %v2231
    %2336 = vmatprep.mubr.bf16.mxu0 %v2000
    %2337 = vmatmul.mubr.bf16.gmra.mrb[0].mxu0 %v1999
    %v2338 = vpop.f32.mrb[0].mxu0
    %v2339 = vadd.f32 %v2299, %v2338
    %v2340 = vpop.f32.mrb[0].mxu0
    %v2341 = vpop.f32.mrb[0].mxu0
    %v2342 = vpop.f32.mrb[0].mxu0
    %2343 = vdwg.mxu0
    %v2344 = vmax.f32 %v2339, 0.0
    %v2345 = vpack.c.bf16 %v2344, %v2344
    %v2346 = vld [vmem:[%s5] sm:$0xf]
    %v2347 = vld [vmem:[%s5 + $0x4] sm:$0xf]
    %v2348 = vld [vmem:[%s5 + $0x8] sm:$0xf]
    %v2349 = vld [vmem:[%s5 + $0xc] sm:$0xf]
    %v2350 = vld [vmem:[%s5 + $0x10] sm:$0xf]
    %v2351 = vld [vmem:[%s5 + $0x14] sm:$0xf]
    %v2352 = vld [vmem:[%s5 + $0x18] sm:$0xf]
    %v2353 = vld [vmem:[%s5 + $0x1c] sm:$0xf]
    %v2354 = vld [vmem:[%s6] sm:$0x1]
    %v2356 = vlaneseq
    %v2357 = vshrl.u32 %v2356, 7
    %v2358 = vsub.s32 0, %v2357
    %v2359 = vrot.slane %v2354, %v2358
    %v2369 = vunpack.c.l.b16 %v2346
    %v2370 = vunpack.c.l.b16 %v2347
    %v2371 = vunpack.c.l.b16 %v2348
    %v2372 = vunpack.c.l.b16 %v2349
    %v2373 = vunpack.c.l.b16 %v2350
    %v2374 = vunpack.c.l.b16 %v2351
    %v2375 = vunpack.c.l.b16 %v2352
    %v2376 = vunpack.c.l.b16 %v2353
    %v2377 = vpack.c.b16 %v2370, %v2369
    %v2378 = vpack.c.b16 %v2372, %v2371
    %v2379 = vpack.c.b16 %v2374, %v2373
    %v2380 = vpack.c.b16 %v2376, %v2375
    %vm2385 = vcmask 523264
    %v2387 = vsel %vm2385, %v2345, 0
    %2389 = vmatprep.subr.bf16.mxu0 0
    %2390 = vmatpush1.bf16.msra.mxu0 %v2377
    %2391 = vmatprep.subr.bf16.mxu0 0
    %2392 = vmatpush1.bf16.msra.mxu0 %v2378
    %2393 = vmatprep.subr.bf16.mxu0 0
    %2394 = vmatpush1.bf16.msra.mxu0 %v2379
    %2395 = vmatprep.subr.bf16.mxu0 0
    %2396 = vmatpush1.bf16.msra.mxu0 %v2380
    %2397 = vmatprep.subr.bf16.mxu0 0
    %2398 = vmatpush1.bf16.msra.mxu0 0
    %2399 = vmatprep.subr.bf16.mxu0 0
    %2400 = vmatpush1.bf16.msra.mxu0 0
    %2401 = vmatprep.subr.bf16.mxu0 0
    %2402 = vmatpush1.bf16.msra.mxu0 0
    %2403 = vmatprep.subr.bf16.mxu0 0
    %2404 = vmatpush1.bf16.msra.mxu0 0
    %2405 = vmatprep.subr.bf16.mxu0 0
    %2406 = vmatpush1.bf16.msra.mxu0 0
    %2407 = vmatprep.subr.bf16.mxu0 0
    %2408 = vmatpush1.bf16.msra.mxu0 0
    %2409 = vmatprep.subr.bf16.mxu0 0
    %2410 = vmatpush1.bf16.msra.mxu0 0
    %2411 = vmatprep.subr.bf16.mxu0 0
    %2412 = vmatpush1.bf16.msra.mxu0 0
    %2413 = vmatprep.subr.bf16.mxu0 0
    %2414 = vmatpush1.bf16.msra.mxu0 0
    %2415 = vmatprep.subr.bf16.mxu0 0
    %2416 = vmatpush1.bf16.msra.mxu0 0
    %2417 = vmatprep.subr.bf16.mxu0 0
    %2418 = vmatpush1.bf16.msra.mxu0 0
    %2419 = vmatprep.subr.bf16.mxu0 0
    %2420 = vmatpush1.bf16.msra.mxu0 0
    %2421 = vmatprep.mubr.bf16.mxu0 0
    %2422 = vmatmul.mubr.bf16.gmra.mrb[0].mxu0 %v2387
    %v2423 = vpop.f32.mrb[0].mxu0
    %v2424 = vadd.f32 %v2359, %v2423
    %v2425 = vpop.f32.mrb[0].mxu0
    %v2426 = vpop.f32.mrb[0].mxu0
    %v2427 = vpop.f32.mrb[0].mxu0
    %2428 = vdwg.mxu0
    %v2429 = vmax.f32 %v2424, 0.0
    %v2430 = vpack.c.bf16 %v2429, %v2429
    %v2431 = vld [vmem:[%s7] sm:$0xf]
    %v2432 = vld [vmem:[%s7 + $0x4] sm:$0xf]
    %v2433 = vld [vmem:[%s7 + $0x8] sm:$0xf]
    %v2434 = vld [vmem:[%s7 + $0xc] sm:$0xf]
    %v2435 = vld [vmem:[%s7 + $0x10] sm:$0xf]
    %v2436 = vld [vmem:[%s7 + $0x14] sm:$0xf]
    %v2437 = vld [vmem:[%s7 + $0x18] sm:$0xf]
    %v2438 = vld [vmem:[%s7 + $0x1c] sm:$0xf]
    %v2439 = vld [vmem:[%s8] sm:$0x1]
    %v2441 = vlaneseq
    %v2442 = vshrl.u32 %v2441, 7
    %v2443 = vsub.s32 0, %v2442
    %v2444 = vrot.slane %v2439, %v2443
    %v2454 = vunpack.c.l.b16 %v2431
    %v2455 = vunpack.c.l.b16 %v2432
    %v2456 = vunpack.c.l.b16 %v2433
    %v2457 = vunpack.c.l.b16 %v2434
    %v2458 = vunpack.c.l.b16 %v2435
    %v2459 = vunpack.c.l.b16 %v2436
    %v2460 = vunpack.c.l.b16 %v2437
    %v2461 = vunpack.c.l.b16 %v2438
    %v2462 = vpack.c.b16 %v2455, %v2454
    %v2463 = vpack.c.b16 %v2457, %v2456
    %v2464 = vpack.c.b16 %v2459, %v2458
    %v2465 = vpack.c.b16 %v2461, %v2460
    %v2471 = vsel %vm2385, %v2430, 0
    %2473 = vmatprep.subr.bf16.mxu0 0
    %2474 = vmatpush1.bf16.msra.mxu0 %v2462
    %2475 = vmatprep.subr.bf16.mxu0 0
    %2476 = vmatpush1.bf16.msra.mxu0 %v2463
    %2477 = vmatprep.subr.bf16.mxu0 0
    %2478 = vmatpush1.bf16.msra.mxu0 %v2464
    %2479 = vmatprep.subr.bf16.mxu0 0
    %2480 = vmatpush1.bf16.msra.mxu0 %v2465
    %2481 = vmatprep.subr.bf16.mxu0 0
    %2482 = vmatpush1.bf16.msra.mxu0 0
    %2483 = vmatprep.subr.bf16.mxu0 0
    %2484 = vmatpush1.bf16.msra.mxu0 0
    %2485 = vmatprep.subr.bf16.mxu0 0
    %2486 = vmatpush1.bf16.msra.mxu0 0
    %2487 = vmatprep.subr.bf16.mxu0 0
    %2488 = vmatpush1.bf16.msra.mxu0 0
    %2489 = vmatprep.subr.bf16.mxu0 0
    %2490 = vmatpush1.bf16.msra.mxu0 0
    %2491 = vmatprep.subr.bf16.mxu0 0
    %2492 = vmatpush1.bf16.msra.mxu0 0
    %2493 = vmatprep.subr.bf16.mxu0 0
    %2494 = vmatpush1.bf16.msra.mxu0 0
    %2495 = vmatprep.subr.bf16.mxu0 0
    %2496 = vmatpush1.bf16.msra.mxu0 0
    %2497 = vmatprep.subr.bf16.mxu0 0
    %2498 = vmatpush1.bf16.msra.mxu0 0
    %2499 = vmatprep.subr.bf16.mxu0 0
    %2500 = vmatpush1.bf16.msra.mxu0 0
    %2501 = vmatprep.subr.bf16.mxu0 0
    %2502 = vmatpush1.bf16.msra.mxu0 0
    %2503 = vmatprep.subr.bf16.mxu0 0
    %2504 = vmatpush1.bf16.msra.mxu0 0
    %2505 = vmatprep.mubr.bf16.mxu0 0
    %2506 = vmatmul.mubr.bf16.gmra.mrb[0].mxu0 %v2471
    %v2507 = vpop.f32.mrb[0].mxu0
    %v2508 = vadd.f32 %v2444, %v2507
    %v2509 = vpop.f32.mrb[0].mxu0
    %v2510 = vpop.f32.mrb[0].mxu0
    %v2511 = vpop.f32.mrb[0].mxu0
    %2512 = vdwg.mxu0
    %v2513 = vlaneseq
    %v2514 = vand.u32 %v2513, 127
    %vm2515 = vcmp.ge.s32.totalorder %v2514, 1
    %vm2516 = vcmp.le.s32.totalorder %v2514, 6
    %vm2517 = vmand %vm2515, %vm2516
    %v2518 = vsel %vm2517, %v2508, 0.0
    %vm2519 = vcmask 1041408
    %v2520 = vsel %vm2519, %v2518, 0.0
    %2521 = vadd.xlane.f32.xlu0 %v2520
    %v2522 = vpop.xlane.xlu0 %2521
    %v2523 = vrot.slane %v2522, 4
    %v2524 = vadd.f32 %v2522, %v2523
    %v2525 = vrot.slane %v2524, 2
    %v2526 = vadd.f32 %v2524, %v2525
    %v2527 = vrot.slane %v2526, 1
    %v2528 = vadd.f32 %v2526, %v2527
    %s2529 = vtos %v2528
    %s2530 = smul.f32 %s2529, 0.083333336
    %2532 = vset.pattern.permute.xlu0 0
    %2533 = vperm.xlu0 %2532, %v2508
    %v2534 = vpop.permute.xlu0 %2533
    %v2536 = vadd.f32 %v2534, %v2508
    %v2537 = vstv %s2530
    %v2538 = vsub.f32 %v2536, %v2537
    %2539 = vst [vmem:[#allocation5] sm:$0x3] %v2538
    // Predicated region
    $region42: #{tpu_custom_call.1} parent=1 // pred_check
      _
    $region43: #{tpu_custom_call.1} parent=1 // pred_check_branch
      %2541 = sbr.rel (0) target = $region45
    $region44: #{tpu_custom_call.1} parent=1 // pred_region
      %s2543 = ssub.s32 32, 32
      %2544 = vsyncadd [#allocation4], %s2543
      %s2546 = sshll.u32 [#allocation5], 4
      %s2547 = int_to_ptr.vmem [resolvable:$true] %s2546
      %2549 = dma.vmem_to_hbm [thread:$0]  %s2547, 32, %s9, [#allocation4]
    $region45: #{tpu_custom_call.1} parent=1 // pred_fallthru
      _
    // Predicated region
    $region46: #{tpu_custom_call.1} parent=1 // pred_check
      _
    $region47: #{tpu_custom_call.1} parent=1 // pred_check_branch
      %2551 = sbr.rel (0) target = $region49
    $region48: #{tpu_custom_call.1} parent=1 // pred_region
      %2552 = dma.done [#allocation4], 32
    $region49: #{tpu_custom_call.1} parent=1 // pred_fallthru
      _
    %2553 = vsyncpa [#allocation3], 1
    %2554 = vsyncpa [#allocation4], 1

</llo_original>
